<compile_context>
chip_gen: v6e
topology: v6e:2x2x1
jax: 0.10.0
libtpu: 0.0.40
codegen_flags: <defaults>
</compile_context>

<pallas_src>
import functools

import jax
import jax.numpy as jnp
import numpy as np
from jax.experimental import pallas as pl
from jax.experimental.pallas import tpu as pltpu

# Matmul operand dtype for the hoisted input projection.  On v6e/v7x set this
# to jnp.bfloat16 (native bf16 MXU, f32 accumulation via preferred_element_type)
# -- kept f32 here so the strict f32 reference check below passes, and because
# v5e has no bf16 VPU/EUP (all gate/c/h elementwise math stays f32 regardless).
MATMUL_DTYPE = jnp.float32


# ----------------------------------------------------------------------------
# Pallas kernel: one bidirectional LSTM layer, full sequence, single invocation
# ----------------------------------------------------------------------------
def _bilstm_layer_kernel(x_ref, wih_ref, b_ref, whh_ref, out_ref, gx_scr,
                         *, T, Bpad, H):
    """Bidirectional LSTM layer over the whole sequence (step-major rows).

    x_ref   : [T*Bpad, 2D]  row block t = [x(time t) | x(time T-1-t)]
    wih_ref : [2D, 8H]      block-diag, gate-permuted input weights
    b_ref   : [1, 8H]       combined (b_ih + b_hh) fwd/bwd, gate-permuted
    whh_ref : [2H, 8H]      block-diag, gate-permuted recurrent weights
    out_ref : [T*Bpad, 2H]  row block t = [h_f(time t) | h_b(time T-1-t)]
    gx_scr  : VMEM scratch [T*Bpad, 8H] hoisted input projection (+bias)

    Gate column order (H-wide blocks): i_f,i_b,f_f,f_b,o_f,o_b,g_f,g_b
    """
    # Hoisted input projection: one MXU matmul for every timestep and both
    # directions; bias folded in so the recurrence never re-adds it.
    gx_scr[...] = (
        jnp.dot(x_ref[...], wih_ref[...], preferred_element_type=jnp.float32)
        + b_ref[...])

    whh = whh_ref[...]             # [2H, 8H], loaded once, loop-resident

    def body(t, carry):
        h_cat, c_cat = carry       # each [Bpad, 2H] = [fwd | bwd]
        rr = pl.multiple_of(t * Bpad, 8)

        # One block-diagonal recurrent matmul for both directions.
        gates = gx_scr[pl.ds(rr, Bpad), :] + jnp.dot(
            h_cat, whh, preferred_element_type=jnp.float32)      # [Bpad, 8H]

        # One wide sigmoid (i,f,o for both dirs) + one tanh (g for both dirs).
        sig = jax.nn.sigmoid(gates[:, 0:6 * H])
        g_cat = jnp.tanh(gates[:, 6 * H:8 * H])
        i_cat = sig[:, 0:2 * H]
        f_cat = sig[:, 2 * H:4 * H]
        o_cat = sig[:, 4 * H:6 * H]

        c_cat = f_cat * c_cat + i_cat * g_cat
        h_cat = o_cat * jnp.tanh(c_cat)

        # Single full-width aligned store per step (no partial tile rewrites).
        out_ref[pl.ds(rr, Bpad), :] = h_cat.astype(out_ref.dtype)
        return h_cat, c_cat

    z = jnp.zeros((Bpad, 2 * H), jnp.float32)
    # Bounded unroll: full unroll at small T, capped to keep vreg pressure sane.
    jax.lax.fori_loop(0, T, body, (z, z), unroll=min(T, 8))


# ----------------------------------------------------------------------------
# Wrapper: weight re-layout + padding + pallas_call (all re-layout is one-time
# XLA glue; for a repeatedly-called model it would be done at param-load time)
# ----------------------------------------------------------------------------
def _perm_gate_rows_to_cols(w):
    """w: [4H, K] PyTorch (i,f,g,o) row blocks -> [K, 4H] cols ordered (i,f,o,g)."""
    H = w.shape[0] // 4
    return jnp.concatenate(
        [w[0:H].T, w[H:2 * H].T, w[3 * H:4 * H].T, w[2 * H:3 * H].T], axis=1)


def _interleave_cols(a, b):
    """a, b: [K, 4H] -> [K, 8H], H-wide column blocks interleaved a0,b0,a1,b1,..."""
    K, H4 = a.shape
    H = H4 // 4
    return jnp.stack([a.reshape(K, 4, H), b.reshape(K, 4, H)], axis=2
                     ).reshape(K, 8 * H)


def _perm_bias(b):
    """b: [4H] (i,f,g,o) -> [4H] (i,f,o,g)."""
    H = b.shape[0] // 4
    return jnp.concatenate([b[0:H], b[H:2 * H], b[3 * H:4 * H], b[2 * H:3 * H]])


def bilstm_layer_pallas(x_tm, w_ih_f, w_hh_f, b_f, w_ih_b, w_hh_b, b_b,
                        matmul_dtype=MATMUL_DTYPE):
    """x_tm: [T, B, D] time-major. Returns [T, B, 2H]."""
    T, B, D = x_tm.shape
    H = w_hh_f.shape[1]            # w_hh: [4H, H]
    Bpad = ((B + 7) // 8) * 8      # sublane-aligned batch rows

    # ---- input prep: pad batch, lane-concat [x(t) | x(T-1-t)] ---------------
    x_pad = jnp.pad(x_tm, ((0, 0), (0, Bpad - B), (0, 0)))
    x_fwd = x_pad.reshape(T * Bpad, D)
    x_rev = jnp.flip(x_pad, axis=0).reshape(T * Bpad, D)
    x_cat = jnp.concatenate([x_fwd, x_rev], axis=1).astype(matmul_dtype)  # [T*Bpad, 2D]

    # ---- weight prep: gate-permuted, block-diagonal, [K, N] layout ----------
    Af = _perm_gate_rows_to_cols(w_ih_f)                  # [D, 4H]
    Ab = _perm_gate_rows_to_cols(w_ih_b)
    wih_block = jnp.concatenate(
        [_interleave_cols(Af, jnp.zeros_like(Ab)),
         _interleave_cols(jnp.zeros_like(Af), Ab)], axis=0
    ).astype(matmul_dtype)                                # [2D, 8H]

    Rf = _perm_gate_rows_to_cols(w_hh_f)                  # [H, 4H]
    Rb = _perm_gate_rows_to_cols(w_hh_b)
    whh_block = jnp.concatenate(
        [_interleave_cols(Rf, jnp.zeros_like(Rb)),
         _interleave_cols(jnp.zeros_like(Rf), Rb)], axis=0)  # [2H, 8H] (f32)

    b_block = jnp.stack(
        [_perm_bias(b_f).reshape(4, H), _perm_bias(b_b).reshape(4, H)],
        axis=1).reshape(1, 8 * H).astype(jnp.float32)     # [1, 8H]

    # ---- VMEM budget (explicit) --------------------------------------------
    est = 4 * (T * Bpad * (2 * D + 8 * H + 2 * H)
               + 2 * D * 8 * H + 2 * H * 8 * H + 8 * H)
    vmem_limit = int(min(4 * est + (4 << 20), 100 << 20))
    # TODO(synk): when T*Bpad*8H*4 bytes approaches ~48 MiB (v7x has 64 MiB
    # physical VMEM), chunk T with a grid axis + carried h/c VMEM scratch; on
    # v7x the two directions could also be split across the 2 TensorCores.

    out2d = pl.pallas_call(
        functools.partial(_bilstm_layer_kernel, T=T, Bpad=Bpad, H=H),
        out_shape=jax.ShapeDtypeStruct((T * Bpad, 2 * H), jnp.float32),
        scratch_shapes=[pltpu.VMEM((T * Bpad, 8 * H), jnp.float32)],
        compiler_params=pltpu.CompilerParams(vmem_limit_bytes=vmem_limit),
    )(x_cat, wih_block, b_block, whh_block)

    # ---- un-pad + time-flip the backward half (free XLA glue) ---------------
    out3 = out2d.reshape(T, Bpad, 2 * H)[:, :B, :]
    out_f = out3[:, :, 0:H]                        # step t == time t (fwd)
    out_b = jnp.flip(out3[:, :, H:2 * H], axis=0)  # step t == time T-1-t (bwd)
    return jnp.concatenate([out_f, out_b], axis=-1)          # [T, B, 2H]


# ----------------------------------------------------------------------------
# Model wrapper (embedding lookup + stacked bidirectional LSTM)
# ----------------------------------------------------------------------------
def lstm_text_forward(token_ids, params):
    """token_ids: int32 [B, T]. Returns output [B, T, 2*H] (PyTorch semantics)."""
    emb = params["embedding"]                    # [V, D]
    # TODO(synk): embedding gather kept as XLA glue; could be folded into the
    # first layer via PrefetchScalarGridSpec + pl.Element row-gather BlockSpec.
    x = jnp.take(emb, token_ids, axis=0)         # [B, T, D]
    x_tm = jnp.transpose(x, (1, 0, 2))           # [T, B, D] time-major

    layer_in = x_tm
    for layer in params["lstm_layers"]:
        layer_in = bilstm_layer_pallas(
            layer_in, layer["w_ih_f"], layer["w_hh_f"], layer["b_f"],
            layer["w_ih_b"], layer["w_hh_b"], layer["b_b"])       # [T, B, 2H]

    # TODO(synk): final (h_n, c_n) states are only printed (not returned) in
    # the PyTorch forward, so they are not materialized here.
    return jnp.transpose(layer_in, (1, 0, 2))    # [B, T, 2H] batch-first


# ----------------------------------------------------------------------------
# Pure-JAX reference (lax.scan) for correctness check
# ----------------------------------------------------------------------------
def _lstm_dir_ref(x_tm, w_ih, w_hh, b, reverse):
    T, B, D = x_tm.shape
    H = w_hh.shape[1]
    xs = jnp.flip(x_tm, axis=0) if reverse else x_tm

    def step(carry, x_t):
        h, c = carry
        gates = x_t @ w_ih.T + h @ w_hh.T + b
        i_g, f_g, g_g, o_g = jnp.split(gates, 4, axis=-1)
        i_g, f_g, o_g = jax.nn.sigmoid(i_g), jax.nn.sigmoid(f_g), jax.nn.sigmoid(o_g)
        g_g = jnp.tanh(g_g)
        c = f_g * c + i_g * g_g
        h = o_g * jnp.tanh(c)
        return (h, c), h

    init = (jnp.zeros((B, H), jnp.float32), jnp.zeros((B, H), jnp.float32))
    _, hs = jax.lax.scan(step, init, xs)
    return jnp.flip(hs, axis=0) if reverse else hs


def lstm_text_forward_ref(token_ids, params):
    emb = params["embedding"]
    x_tm = jnp.transpose(jnp.take(emb, token_ids, axis=0), (1, 0, 2))
    layer_in = x_tm
    for layer in params["lstm_layers"]:
        out_f = _lstm_dir_ref(layer_in, layer["w_ih_f"], layer["w_hh_f"], layer["b_f"], False)
        out_b = _lstm_dir_ref(layer_in, layer["w_ih_b"], layer["w_hh_b"], layer["b_b"], True)
        layer_in = jnp.concatenate([out_f, out_b], axis=-1)
    return jnp.transpose(layer_in, (1, 0, 2))


# ----------------------------------------------------------------------------
# Deterministic parameter init (shapes implied by nn.Embedding + nn.LSTM)
# ----------------------------------------------------------------------------
def init_params(key, V, D, H, num_layers):
    keys = jax.random.split(key, 1 + num_layers * 8)
    embedding = jax.random.normal(keys[0], (V, D), jnp.float32) * 0.1  # "pretrained"
    k = 1.0 / np.sqrt(H)
    layers = []
    ki = 1
    for l in range(num_layers):
        in_dim = D if l == 0 else 2 * H

        def u(idx, shape):
            return jax.random.uniform(keys[idx], shape, jnp.float32, -k, k)

        layers.append({
            "w_ih_f": u(ki + 0, (4 * H, in_dim)),
            "w_hh_f": u(ki + 1, (4 * H, H)),
            "b_f": u(ki + 2, (4 * H,)) + u(ki + 3, (4 * H,)),   # b_ih + b_hh combined
            "w_ih_b": u(ki + 4, (4 * H, in_dim)),
            "w_hh_b": u(ki + 5, (4 * H, H)),
            "b_b": u(ki + 6, (4 * H,)) + u(ki + 7, (4 * H,)),
        })
        ki += 8
    return {"embedding": embedding, "lstm_layers": layers}


if __name__ == "__main__":
    # Small config consistent with the module:
    #   vocab V=50, embed dim D=32, hidden_size H=32, lstm_num=1, batch=2, seq=8
    V, D, H, NUM_LAYERS = 50, 32, 32, 1
    B, T = 2, 8

    key = jax.random.PRNGKey(0)
    k_param, k_ids = jax.random.split(key)
    params = init_params(k_param, V, D, H, NUM_LAYERS)
    token_ids = jax.random.randint(k_ids, (B, T), 0, V, dtype=jnp.int32)

    out = jax.jit(lstm_text_forward)(token_ids, params)     # [B, T, 2H]
    out = jax.block_until_ready(out)

    ref = jax.block_until_ready(lstm_text_forward_ref(token_ids, params))
    assert out.shape == (B, T, 2 * H), out.shape
    np.testing.assert_allclose(np.asarray(out), np.asarray(ref), rtol=1e-4, atol=1e-4)

    print("KERNEL_OK")
</pallas_src>

<mosaic_0001>
module attributes {stable_mosaic.version = 11 : i64} {
  func.func @_bilstm_layer_kernel(%arg0: memref<64x64xf32, #tpu.memory_space<vmem>>, %arg1: memref<64x256xf32, #tpu.memory_space<vmem>>, %arg2: memref<1x256xf32, #tpu.memory_space<vmem>>, %arg3: memref<64x256xf32, #tpu.memory_space<vmem>>, %arg4: memref<64x64xf32, #tpu.memory_space<vmem>>, %arg5: memref<64x256xf32, #tpu.memory_space<vmem>>) attributes {dimension_semantics = [], scalar_prefetch = 0 : i64, scratch_operands = 1 : i64, tpu.core_type = #tpu.core_type<tc>} {
    %c0 = arith.constant 0 : index
    %c0_0 = arith.constant 0 : index
    %0 = vector.load %arg0[%c0, %c0_0] : memref<64x64xf32, #tpu.memory_space<vmem>>, vector<64x64xf32>
    %c0_1 = arith.constant 0 : index
    %c0_2 = arith.constant 0 : index
    %1 = vector.load %arg1[%c0_1, %c0_2] : memref<64x256xf32, #tpu.memory_space<vmem>>, vector<64x256xf32>
    %cst = arith.constant dense<0.000000e+00> : vector<64x256xf32>
    %2 = tpu.matmul %0, %1, %cst {dimension_numbers = #tpu.dot_dimension_numbers<[1], [0], [0], [1], [0, 0, 1, 1], [], []>} : vector<64x64xf32>, vector<64x256xf32>, vector<64x256xf32> -> vector<64x256xf32>
    %c0_3 = arith.constant 0 : index
    %c0_4 = arith.constant 0 : index
    %3 = vector.load %arg2[%c0_3, %c0_4] : memref<1x256xf32, #tpu.memory_space<vmem>>, vector<1x256xf32>
    %4 = vector.broadcast %3 : vector<1x256xf32> to vector<64x256xf32>
    %5 = arith.addf %2, %4 : vector<64x256xf32>
    %c0_5 = arith.constant 0 : index
    %c0_6 = arith.constant 0 : index
    %6 = vector.load %arg5[%c0_5, %c0_6] : memref<64x256xf32, #tpu.memory_space<vmem>>, vector<64x256xf32>
    tpu.vector_store %arg5[%c0_5, %c0_6], %5 {strides = array<i32>} : memref<64x256xf32, #tpu.memory_space<vmem>>, vector<64x256xf32>,
    %c0_7 = arith.constant 0 : index
    %c0_8 = arith.constant 0 : index
    %7 = vector.load %arg3[%c0_7, %c0_8] : memref<64x256xf32, #tpu.memory_space<vmem>>, vector<64x256xf32>
    %cst_9 = arith.constant 0.000000e+00 : f32
    %8 = vector.broadcast %cst_9 : f32 to vector<8x64xf32>
    %c0_i32 = arith.constant 0 : i32
    %c8_i32 = arith.constant 8 : i32
    %9 = arith.muli %c0_i32, %c8_i32 : i32
    %10 = tpu.assume_multiple %9, 8 : i32
    %11 = arith.index_cast %10 : i32 to index
    %c0_10 = arith.constant 0 : index
    %12 = vector.load %arg5[%11, %c0_10] : memref<64x256xf32, #tpu.memory_space<vmem>>, vector<8x256xf32>
    %cst_11 = arith.constant dense<0.000000e+00> : vector<8x256xf32>
    %13 = tpu.matmul %8, %7, %cst_11 {dimension_numbers = #tpu.dot_dimension_numbers<[1], [0], [0], [1], [0, 0, 1, 1], [], []>} : vector<8x64xf32>, vector<64x256xf32>, vector<8x256xf32> -> vector<8x256xf32>
    %14 = arith.addf %12, %13 : vector<8x256xf32>
    %15 = vector.extract_strided_slice %14 {offsets = [0, 0], sizes = [8, 192], strides = [1, 1]} : vector<8x256xf32> to vector<8x192xf32>
    %16 = arith.negf %15 : vector<8x192xf32>
    %17 = math.exp %16 : vector<8x192xf32>
    %cst_12 = arith.constant 1.000000e+00 : f32
    %18 = vector.broadcast %cst_12 : f32 to vector<8x192xf32>
    %19 = arith.addf %18, %17 : vector<8x192xf32>
    %20 = arith.divf %18, %19 : vector<8x192xf32>
    %21 = vector.extract_strided_slice %14 {offsets = [0, 192], sizes = [8, 64], strides = [1, 1]} : vector<8x256xf32> to vector<8x64xf32>
    %22 = math.tanh %21 : vector<8x64xf32>
    %23 = vector.extract_strided_slice %20 {offsets = [0, 0], sizes = [8, 64], strides = [1, 1]} : vector<8x192xf32> to vector<8x64xf32>
    %24 = vector.extract_strided_slice %20 {offsets = [0, 64], sizes = [8, 64], strides = [1, 1]} : vector<8x192xf32> to vector<8x64xf32>
    %25 = vector.extract_strided_slice %20 {offsets = [0, 128], sizes = [8, 64], strides = [1, 1]} : vector<8x192xf32> to vector<8x64xf32>
    %26 = arith.mulf %24, %8 : vector<8x64xf32>
    %27 = arith.mulf %23, %22 : vector<8x64xf32>
    %28 = arith.addf %26, %27 : vector<8x64xf32>
    %29 = math.tanh %28 : vector<8x64xf32>
    %30 = arith.mulf %25, %29 : vector<8x64xf32>
    %31 = arith.index_cast %10 : i32 to index
    %c0_13 = arith.constant 0 : index
    %32 = vector.load %arg4[%31, %c0_13] : memref<64x64xf32, #tpu.memory_space<vmem>>, vector<8x64xf32>
    tpu.vector_store %arg4[%31, %c0_13], %30 {strides = array<i32>} : memref<64x64xf32, #tpu.memory_space<vmem>>, vector<8x64xf32>,
    %c1_i32 = arith.constant 1 : i32
    %c8_i32_14 = arith.constant 8 : i32
    %33 = arith.muli %c1_i32, %c8_i32_14 : i32
    %34 = tpu.assume_multiple %33, 8 : i32
    %35 = arith.index_cast %34 : i32 to index
    %c0_15 = arith.constant 0 : index
    %36 = vector.load %arg5[%35, %c0_15] : memref<64x256xf32, #tpu.memory_space<vmem>>, vector<8x256xf32>
    %cst_16 = arith.constant dense<0.000000e+00> : vector<8x256xf32>
    %37 = tpu.matmul %30, %7, %cst_16 {dimension_numbers = #tpu.dot_dimension_numbers<[1], [0], [0], [1], [0, 0, 1, 1], [], []>} : vector<8x64xf32>, vector<64x256xf32>, vector<8x256xf32> -> vector<8x256xf32>
    %38 = arith.addf %36, %37 : vector<8x256xf32>
    %39 = vector.extract_strided_slice %38 {offsets = [0, 0], sizes = [8, 192], strides = [1, 1]} : vector<8x256xf32> to vector<8x192xf32>
    %40 = arith.negf %39 : vector<8x192xf32>
    %41 = math.exp %40 : vector<8x192xf32>
    %cst_17 = arith.constant 1.000000e+00 : f32
    %42 = vector.broadcast %cst_17 : f32 to vector<8x192xf32>
    %43 = arith.addf %42, %41 : vector<8x192xf32>
    %44 = arith.divf %42, %43 : vector<8x192xf32>
    %45 = vector.extract_strided_slice %38 {offsets = [0, 192], sizes = [8, 64], strides = [1, 1]} : vector<8x256xf32> to vector<8x64xf32>
    %46 = math.tanh %45 : vector<8x64xf32>
    %47 = vector.extract_strided_slice %44 {offsets = [0, 0], sizes = [8, 64], strides = [1, 1]} : vector<8x192xf32> to vector<8x64xf32>
    %48 = vector.extract_strided_slice %44 {offsets = [0, 64], sizes = [8, 64], strides = [1, 1]} : vector<8x192xf32> to vector<8x64xf32>
    %49 = vector.extract_strided_slice %44 {offsets = [0, 128], sizes = [8, 64], strides = [1, 1]} : vector<8x192xf32> to vector<8x64xf32>
    %50 = arith.mulf %48, %28 : vector<8x64xf32>
    %51 = arith.mulf %47, %46 : vector<8x64xf32>
    %52 = arith.addf %50, %51 : vector<8x64xf32>
    %53 = math.tanh %52 : vector<8x64xf32>
    %54 = arith.mulf %49, %53 : vector<8x64xf32>
    %55 = arith.index_cast %34 : i32 to index
    %c0_18 = arith.constant 0 : index
    %56 = vector.load %arg4[%55, %c0_18] : memref<64x64xf32, #tpu.memory_space<vmem>>, vector<8x64xf32>
    tpu.vector_store %arg4[%55, %c0_18], %54 {strides = array<i32>} : memref<64x64xf32, #tpu.memory_space<vmem>>, vector<8x64xf32>,
    %c2_i32 = arith.constant 2 : i32
    %c8_i32_19 = arith.constant 8 : i32
    %57 = arith.muli %c2_i32, %c8_i32_19 : i32
    %58 = tpu.assume_multiple %57, 8 : i32
    %59 = arith.index_cast %58 : i32 to index
    %c0_20 = arith.constant 0 : index
    %60 = vector.load %arg5[%59, %c0_20] : memref<64x256xf32, #tpu.memory_space<vmem>>, vector<8x256xf32>
    %cst_21 = arith.constant dense<0.000000e+00> : vector<8x256xf32>
    %61 = tpu.matmul %54, %7, %cst_21 {dimension_numbers = #tpu.dot_dimension_numbers<[1], [0], [0], [1], [0, 0, 1, 1], [], []>} : vector<8x64xf32>, vector<64x256xf32>, vector<8x256xf32> -> vector<8x256xf32>
    %62 = arith.addf %60, %61 : vector<8x256xf32>
    %63 = vector.extract_strided_slice %62 {offsets = [0, 0], sizes = [8, 192], strides = [1, 1]} : vector<8x256xf32> to vector<8x192xf32>
    %64 = arith.negf %63 : vector<8x192xf32>
    %65 = math.exp %64 : vector<8x192xf32>
    %cst_22 = arith.constant 1.000000e+00 : f32
    %66 = vector.broadcast %cst_22 : f32 to vector<8x192xf32>
    %67 = arith.addf %66, %65 : vector<8x192xf32>
    %68 = arith.divf %66, %67 : vector<8x192xf32>
    %69 = vector.extract_strided_slice %62 {offsets = [0, 192], sizes = [8, 64], strides = [1, 1]} : vector<8x256xf32> to vector<8x64xf32>
    %70 = math.tanh %69 : vector<8x64xf32>
    %71 = vector.extract_strided_slice %68 {offsets = [0, 0], sizes = [8, 64], strides = [1, 1]} : vector<8x192xf32> to vector<8x64xf32>
    %72 = vector.extract_strided_slice %68 {offsets = [0, 64], sizes = [8, 64], strides = [1, 1]} : vector<8x192xf32> to vector<8x64xf32>
    %73 = vector.extract_strided_slice %68 {offsets = [0, 128], sizes = [8, 64], strides = [1, 1]} : vector<8x192xf32> to vector<8x64xf32>
    %74 = arith.mulf %72, %52 : vector<8x64xf32>
    %75 = arith.mulf %71, %70 : vector<8x64xf32>
    %76 = arith.addf %74, %75 : vector<8x64xf32>
    %77 = math.tanh %76 : vector<8x64xf32>
    %78 = arith.mulf %73, %77 : vector<8x64xf32>
    %79 = arith.index_cast %58 : i32 to index
    %c0_23 = arith.constant 0 : index
    %80 = vector.load %arg4[%79, %c0_23] : memref<64x64xf32, #tpu.memory_space<vmem>>, vector<8x64xf32>
    tpu.vector_store %arg4[%79, %c0_23], %78 {strides = array<i32>} : memref<64x64xf32, #tpu.memory_space<vmem>>, vector<8x64xf32>,
    %c3_i32 = arith.constant 3 : i32
    %c8_i32_24 = arith.constant 8 : i32
    %81 = arith.muli %c3_i32, %c8_i32_24 : i32
    %82 = tpu.assume_multiple %81, 8 : i32
    %83 = arith.index_cast %82 : i32 to index
    %c0_25 = arith.constant 0 : index
    %84 = vector.load %arg5[%83, %c0_25] : memref<64x256xf32, #tpu.memory_space<vmem>>, vector<8x256xf32>
    %cst_26 = arith.constant dense<0.000000e+00> : vector<8x256xf32>
    %85 = tpu.matmul %78, %7, %cst_26 {dimension_numbers = #tpu.dot_dimension_numbers<[1], [0], [0], [1], [0, 0, 1, 1], [], []>} : vector<8x64xf32>, vector<64x256xf32>, vector<8x256xf32> -> vector<8x256xf32>
    %86 = arith.addf %84, %85 : vector<8x256xf32>
    %87 = vector.extract_strided_slice %86 {offsets = [0, 0], sizes = [8, 192], strides = [1, 1]} : vector<8x256xf32> to vector<8x192xf32>
    %88 = arith.negf %87 : vector<8x192xf32>
    %89 = math.exp %88 : vector<8x192xf32>
    %cst_27 = arith.constant 1.000000e+00 : f32
    %90 = vector.broadcast %cst_27 : f32 to vector<8x192xf32>
    %91 = arith.addf %90, %89 : vector<8x192xf32>
    %92 = arith.divf %90, %91 : vector<8x192xf32>
    %93 = vector.extract_strided_slice %86 {offsets = [0, 192], sizes = [8, 64], strides = [1, 1]} : vector<8x256xf32> to vector<8x64xf32>
    %94 = math.tanh %93 : vector<8x64xf32>
    %95 = vector.extract_strided_slice %92 {offsets = [0, 0], sizes = [8, 64], strides = [1, 1]} : vector<8x192xf32> to vector<8x64xf32>
    %96 = vector.extract_strided_slice %92 {offsets = [0, 64], sizes = [8, 64], strides = [1, 1]} : vector<8x192xf32> to vector<8x64xf32>
    %97 = vector.extract_strided_slice %92 {offsets = [0, 128], sizes = [8, 64], strides = [1, 1]} : vector<8x192xf32> to vector<8x64xf32>
    %98 = arith.mulf %96, %76 : vector<8x64xf32>
    %99 = arith.mulf %95, %94 : vector<8x64xf32>
    %100 = arith.addf %98, %99 : vector<8x64xf32>
    %101 = math.tanh %100 : vector<8x64xf32>
    %102 = arith.mulf %97, %101 : vector<8x64xf32>
    %103 = arith.index_cast %82 : i32 to index
    %c0_28 = arith.constant 0 : index
    %104 = vector.load %arg4[%103, %c0_28] : memref<64x64xf32, #tpu.memory_space<vmem>>, vector<8x64xf32>
    tpu.vector_store %arg4[%103, %c0_28], %102 {strides = array<i32>} : memref<64x64xf32, #tpu.memory_space<vmem>>, vector<8x64xf32>,
    %c4_i32 = arith.constant 4 : i32
    %c8_i32_29 = arith.constant 8 : i32
    %105 = arith.muli %c4_i32, %c8_i32_29 : i32
    %106 = tpu.assume_multiple %105, 8 : i32
    %107 = arith.index_cast %106 : i32 to index
    %c0_30 = arith.constant 0 : index
    %108 = vector.load %arg5[%107, %c0_30] : memref<64x256xf32, #tpu.memory_space<vmem>>, vector<8x256xf32>
    %cst_31 = arith.constant dense<0.000000e+00> : vector<8x256xf32>
    %109 = tpu.matmul %102, %7, %cst_31 {dimension_numbers = #tpu.dot_dimension_numbers<[1], [0], [0], [1], [0, 0, 1, 1], [], []>} : vector<8x64xf32>, vector<64x256xf32>, vector<8x256xf32> -> vector<8x256xf32>
    %110 = arith.addf %108, %109 : vector<8x256xf32>
    %111 = vector.extract_strided_slice %110 {offsets = [0, 0], sizes = [8, 192], strides = [1, 1]} : vector<8x256xf32> to vector<8x192xf32>
    %112 = arith.negf %111 : vector<8x192xf32>
    %113 = math.exp %112 : vector<8x192xf32>
    %cst_32 = arith.constant 1.000000e+00 : f32
    %114 = vector.broadcast %cst_32 : f32 to vector<8x192xf32>
    %115 = arith.addf %114, %113 : vector<8x192xf32>
    %116 = arith.divf %114, %115 : vector<8x192xf32>
    %117 = vector.extract_strided_slice %110 {offsets = [0, 192], sizes = [8, 64], strides = [1, 1]} : vector<8x256xf32> to vector<8x64xf32>
    %118 = math.tanh %117 : vector<8x64xf32>
    %119 = vector.extract_strided_slice %116 {offsets = [0, 0], sizes = [8, 64], strides = [1, 1]} : vector<8x192xf32> to vector<8x64xf32>
    %120 = vector.extract_strided_slice %116 {offsets = [0, 64], sizes = [8, 64], strides = [1, 1]} : vector<8x192xf32> to vector<8x64xf32>
    %121 = vector.extract_strided_slice %116 {offsets = [0, 128], sizes = [8, 64], strides = [1, 1]} : vector<8x192xf32> to vector<8x64xf32>
    %122 = arith.mulf %120, %100 : vector<8x64xf32>
    %123 = arith.mulf %119, %118 : vector<8x64xf32>
    %124 = arith.addf %122, %123 : vector<8x64xf32>
    %125 = math.tanh %124 : vector<8x64xf32>
    %126 = arith.mulf %121, %125 : vector<8x64xf32>
    %127 = arith.index_cast %106 : i32 to index
    %c0_33 = arith.constant 0 : index
    %128 = vector.load %arg4[%127, %c0_33] : memref<64x64xf32, #tpu.memory_space<vmem>>, vector<8x64xf32>
    tpu.vector_store %arg4[%127, %c0_33], %126 {strides = array<i32>} : memref<64x64xf32, #tpu.memory_space<vmem>>, vector<8x64xf32>,
    %c5_i32 = arith.constant 5 : i32
    %c8_i32_34 = arith.constant 8 : i32
    %129 = arith.muli %c5_i32, %c8_i32_34 : i32
    %130 = tpu.assume_multiple %129, 8 : i32
    %131 = arith.index_cast %130 : i32 to index
    %c0_35 = arith.constant 0 : index
    %132 = vector.load %arg5[%131, %c0_35] : memref<64x256xf32, #tpu.memory_space<vmem>>, vector<8x256xf32>
    %cst_36 = arith.constant dense<0.000000e+00> : vector<8x256xf32>
    %133 = tpu.matmul %126, %7, %cst_36 {dimension_numbers = #tpu.dot_dimension_numbers<[1], [0], [0], [1], [0, 0, 1, 1], [], []>} : vector<8x64xf32>, vector<64x256xf32>, vector<8x256xf32> -> vector<8x256xf32>
    %134 = arith.addf %132, %133 : vector<8x256xf32>
    %135 = vector.extract_strided_slice %134 {offsets = [0, 0], sizes = [8, 192], strides = [1, 1]} : vector<8x256xf32> to vector<8x192xf32>
    %136 = arith.negf %135 : vector<8x192xf32>
    %137 = math.exp %136 : vector<8x192xf32>
    %cst_37 = arith.constant 1.000000e+00 : f32
    %138 = vector.broadcast %cst_37 : f32 to vector<8x192xf32>
    %139 = arith.addf %138, %137 : vector<8x192xf32>
    %140 = arith.divf %138, %139 : vector<8x192xf32>
    %141 = vector.extract_strided_slice %134 {offsets = [0, 192], sizes = [8, 64], strides = [1, 1]} : vector<8x256xf32> to vector<8x64xf32>
    %142 = math.tanh %141 : vector<8x64xf32>
    %143 = vector.extract_strided_slice %140 {offsets = [0, 0], sizes = [8, 64], strides = [1, 1]} : vector<8x192xf32> to vector<8x64xf32>
    %144 = vector.extract_strided_slice %140 {offsets = [0, 64], sizes = [8, 64], strides = [1, 1]} : vector<8x192xf32> to vector<8x64xf32>
    %145 = vector.extract_strided_slice %140 {offsets = [0, 128], sizes = [8, 64], strides = [1, 1]} : vector<8x192xf32> to vector<8x64xf32>
    %146 = arith.mulf %144, %124 : vector<8x64xf32>
    %147 = arith.mulf %143, %142 : vector<8x64xf32>
    %148 = arith.addf %146, %147 : vector<8x64xf32>
    %149 = math.tanh %148 : vector<8x64xf32>
    %150 = arith.mulf %145, %149 : vector<8x64xf32>
    %151 = arith.index_cast %130 : i32 to index
    %c0_38 = arith.constant 0 : index
    %152 = vector.load %arg4[%151, %c0_38] : memref<64x64xf32, #tpu.memory_space<vmem>>, vector<8x64xf32>
    tpu.vector_store %arg4[%151, %c0_38], %150 {strides = array<i32>} : memref<64x64xf32, #tpu.memory_space<vmem>>, vector<8x64xf32>,
    %c6_i32 = arith.constant 6 : i32
    %c8_i32_39 = arith.constant 8 : i32
    %153 = arith.muli %c6_i32, %c8_i32_39 : i32
    %154 = tpu.assume_multiple %153, 8 : i32
    %155 = arith.index_cast %154 : i32 to index
    %c0_40 = arith.constant 0 : index
    %156 = vector.load %arg5[%155, %c0_40] : memref<64x256xf32, #tpu.memory_space<vmem>>, vector<8x256xf32>
    %cst_41 = arith.constant dense<0.000000e+00> : vector<8x256xf32>
    %157 = tpu.matmul %150, %7, %cst_41 {dimension_numbers = #tpu.dot_dimension_numbers<[1], [0], [0], [1], [0, 0, 1, 1], [], []>} : vector<8x64xf32>, vector<64x256xf32>, vector<8x256xf32> -> vector<8x256xf32>
    %158 = arith.addf %156, %157 : vector<8x256xf32>
    %159 = vector.extract_strided_slice %158 {offsets = [0, 0], sizes = [8, 192], strides = [1, 1]} : vector<8x256xf32> to vector<8x192xf32>
    %160 = arith.negf %159 : vector<8x192xf32>
    %161 = math.exp %160 : vector<8x192xf32>
    %cst_42 = arith.constant 1.000000e+00 : f32
    %162 = vector.broadcast %cst_42 : f32 to vector<8x192xf32>
    %163 = arith.addf %162, %161 : vector<8x192xf32>
    %164 = arith.divf %162, %163 : vector<8x192xf32>
    %165 = vector.extract_strided_slice %158 {offsets = [0, 192], sizes = [8, 64], strides = [1, 1]} : vector<8x256xf32> to vector<8x64xf32>
    %166 = math.tanh %165 : vector<8x64xf32>
    %167 = vector.extract_strided_slice %164 {offsets = [0, 0], sizes = [8, 64], strides = [1, 1]} : vector<8x192xf32> to vector<8x64xf32>
    %168 = vector.extract_strided_slice %164 {offsets = [0, 64], sizes = [8, 64], strides = [1, 1]} : vector<8x192xf32> to vector<8x64xf32>
    %169 = vector.extract_strided_slice %164 {offsets = [0, 128], sizes = [8, 64], strides = [1, 1]} : vector<8x192xf32> to vector<8x64xf32>
    %170 = arith.mulf %168, %148 : vector<8x64xf32>
    %171 = arith.mulf %167, %166 : vector<8x64xf32>
    %172 = arith.addf %170, %171 : vector<8x64xf32>
    %173 = math.tanh %172 : vector<8x64xf32>
    %174 = arith.mulf %169, %173 : vector<8x64xf32>
    %175 = arith.index_cast %154 : i32 to index
    %c0_43 = arith.constant 0 : index
    %176 = vector.load %arg4[%175, %c0_43] : memref<64x64xf32, #tpu.memory_space<vmem>>, vector<8x64xf32>
    tpu.vector_store %arg4[%175, %c0_43], %174 {strides = array<i32>} : memref<64x64xf32, #tpu.memory_space<vmem>>, vector<8x64xf32>,
    %c7_i32 = arith.constant 7 : i32
    %c8_i32_44 = arith.constant 8 : i32
    %177 = arith.muli %c7_i32, %c8_i32_44 : i32
    %178 = tpu.assume_multiple %177, 8 : i32
    %179 = arith.index_cast %178 : i32 to index
    %c0_45 = arith.constant 0 : index
    %180 = vector.load %arg5[%179, %c0_45] : memref<64x256xf32, #tpu.memory_space<vmem>>, vector<8x256xf32>
    %cst_46 = arith.constant dense<0.000000e+00> : vector<8x256xf32>
    %181 = tpu.matmul %174, %7, %cst_46 {dimension_numbers = #tpu.dot_dimension_numbers<[1], [0], [0], [1], [0, 0, 1, 1], [], []>} : vector<8x64xf32>, vector<64x256xf32>, vector<8x256xf32> -> vector<8x256xf32>
    %182 = arith.addf %180, %181 : vector<8x256xf32>
    %183 = vector.extract_strided_slice %182 {offsets = [0, 0], sizes = [8, 192], strides = [1, 1]} : vector<8x256xf32> to vector<8x192xf32>
    %184 = arith.negf %183 : vector<8x192xf32>
    %185 = math.exp %184 : vector<8x192xf32>
    %cst_47 = arith.constant 1.000000e+00 : f32
    %186 = vector.broadcast %cst_47 : f32 to vector<8x192xf32>
    %187 = arith.addf %186, %185 : vector<8x192xf32>
    %188 = arith.divf %186, %187 : vector<8x192xf32>
    %189 = vector.extract_strided_slice %182 {offsets = [0, 192], sizes = [8, 64], strides = [1, 1]} : vector<8x256xf32> to vector<8x64xf32>
    %190 = math.tanh %189 : vector<8x64xf32>
    %191 = vector.extract_strided_slice %188 {offsets = [0, 0], sizes = [8, 64], strides = [1, 1]} : vector<8x192xf32> to vector<8x64xf32>
    %192 = vector.extract_strided_slice %188 {offsets = [0, 64], sizes = [8, 64], strides = [1, 1]} : vector<8x192xf32> to vector<8x64xf32>
    %193 = vector.extract_strided_slice %188 {offsets = [0, 128], sizes = [8, 64], strides = [1, 1]} : vector<8x192xf32> to vector<8x64xf32>
    %194 = arith.mulf %192, %172 : vector<8x64xf32>
    %195 = arith.mulf %191, %190 : vector<8x64xf32>
    %196 = arith.addf %194, %195 : vector<8x64xf32>
    %197 = math.tanh %196 : vector<8x64xf32>
    %198 = arith.mulf %193, %197 : vector<8x64xf32>
    %199 = arith.index_cast %178 : i32 to index
    %c0_48 = arith.constant 0 : index
    %200 = vector.load %arg4[%199, %c0_48] : memref<64x64xf32, #tpu.memory_space<vmem>>, vector<8x64xf32>
    tpu.vector_store %arg4[%199, %c0_48], %198 {strides = array<i32>} : memref<64x64xf32, #tpu.memory_space<vmem>>, vector<8x64xf32>,
    %c8_i32_49 = arith.constant 8 : i32
    return
  }
}

</mosaic_0001>

<llo_original>
// kernel: lstm_text_forward.1
$region0: #{lstm_text_forward.1}
  #allocation0 [shape = 'u32[]', space=smem, size = 0x4, offset = 0x4, fixed_abs, tag = 'smem constant byte address 0x4 - core index']
  #allocation1 [shape = 'u32[144,128]{1,0:T(1,128)}', space=vmem, size = 0x12000, scoped, tag = 'internal scratch']
  #allocation2 [shape = 'f32[64,256]{1,0:T(8,128)}', space=vmem, size = 0x10000, scoped, tag = 'scratch operand']
  %s0 = inlined_call_operand.vmem [shape: f32[64,64], index: 0, kind: input, shape index: {}]
  %s1 = inlined_call_operand.vmem [shape: f32[64,256], index: 1, kind: input, shape index: {}]
  %s2 = inlined_call_operand.vmem [shape: f32[1,256], index: 2, kind: input, shape index: {}]
  %s3 = inlined_call_operand.vmem [shape: f32[64,256], index: 3, kind: input, shape index: {}]
  %s4 = inlined_call_operand.vmem [shape: f32[64,64], index: 4, kind: output, shape index: {}]
  %s5 = sld [smem:[#allocation0]]
  $region26: #{lstm_text_forward.1} parent=0
    _
  %s7 = ssub.s32 1, %s5
  %s8 = scalar_select 0, %s7, %s5
  // Predicated region
  $region2: #{lstm_text_forward.1} parent=0 // pred_check
    _
  $region3: #{lstm_text_forward.1} parent=0 // pred_check_branch
    %10 = sbr.rel (0) target = $region5
  $region4: #{lstm_text_forward.1} parent=0 // pred_region
    _
  $region5: #{lstm_text_forward.1} parent=0 // pred_fallthru
    _
  // Predicated region
  $region6: #{lstm_text_forward.1} parent=0 // pred_check
    _
  $region7: #{lstm_text_forward.1} parent=0 // pred_check_branch
    %12 = sbr.rel (0) target = $region9
  $region8: #{lstm_text_forward.1} parent=0 // pred_region
    _
  $region9: #{lstm_text_forward.1} parent=0 // pred_fallthru
    _
  // Predicated region
  $region10: #{lstm_text_forward.1} parent=0 // pred_check
    _
  $region11: #{lstm_text_forward.1} parent=0 // pred_check_branch
    %14 = sbr.rel (0) target = $region13
  $region12: #{lstm_text_forward.1} parent=0 // pred_region
    _
  $region13: #{lstm_text_forward.1} parent=0 // pred_fallthru
    _
  // Predicated region
  $region14: #{lstm_text_forward.1} parent=0 // pred_check
    _
  $region15: #{lstm_text_forward.1} parent=0 // pred_check_branch
    %16 = sbr.rel (0) target = $region17
  $region16: #{lstm_text_forward.1} parent=0 // pred_region
    _
  $region17: #{lstm_text_forward.1} parent=0 // pred_fallthru
    _
  %v17 = vld [vmem:[%s0] sm:$0xff]
  %v18 = vld [vmem:[%s0 + $0x8] sm:$0xff]
  %v19 = vld [vmem:[%s0 + $0x10] sm:$0xff]
  %v20 = vld [vmem:[%s0 + $0x18] sm:$0xff]
  %v21 = vld [vmem:[%s0 + $0x20] sm:$0xff]
  %v22 = vld [vmem:[%s0 + $0x28] sm:$0xff]
  %v23 = vld [vmem:[%s0 + $0x30] sm:$0xff]
  %v24 = vld [vmem:[%s0 + $0x38] sm:$0xff]
  %v25 = vld [vmem:[%s1] sm:$0xff]
  %v26 = vld [vmem:[%s1 + $0x8] sm:$0xff]
  %v27 = vld [vmem:[%s1 + $0x10] sm:$0xff]
  %v28 = vld [vmem:[%s1 + $0x18] sm:$0xff]
  %v29 = vld [vmem:[%s1 + $0x20] sm:$0xff]
  %v30 = vld [vmem:[%s1 + $0x28] sm:$0xff]
  %v31 = vld [vmem:[%s1 + $0x30] sm:$0xff]
  %v32 = vld [vmem:[%s1 + $0x38] sm:$0xff]
  %v33 = vld [vmem:[%s1 + $0x40] sm:$0xff]
  %v34 = vld [vmem:[%s1 + $0x48] sm:$0xff]
  %v35 = vld [vmem:[%s1 + $0x50] sm:$0xff]
  %v36 = vld [vmem:[%s1 + $0x58] sm:$0xff]
  %v37 = vld [vmem:[%s1 + $0x60] sm:$0xff]
  %v38 = vld [vmem:[%s1 + $0x68] sm:$0xff]
  %v39 = vld [vmem:[%s1 + $0x70] sm:$0xff]
  %v40 = vld [vmem:[%s1 + $0x78] sm:$0xff]
  %v41 = vld [vmem:[%s2] sm:$0x3]
  %v43 = vlaneseq
  %v44 = vshrl.u32 %v43, 7
  %v45 = vsub.s32 0, %v44
  %v46 = vrot.slane %v41, %v45
  %v47 = vlaneseq
  %v48 = vshrl.u32 %v47, 7
  %v49 = vsub.s32 1, %v48
  %v50 = vrot.slane %v41, %v49
  %vm53 = vcmask 523264
  %v55 = vsel %vm53, %v17, 0
  %v58 = vsel %vm53, %v18, 0
  %v61 = vsel %vm53, %v19, 0
  %v64 = vsel %vm53, %v20, 0
  %v67 = vsel %vm53, %v21, 0
  %v70 = vsel %vm53, %v22, 0
  %v73 = vsel %vm53, %v23, 0
  %v76 = vsel %vm53, %v24, 0
  %78 = vmatprep.subr.mxu0 0.0
  %79 = vmatpush1.msra.mxu0 0.0
  %80 = vmatprep.subr.mxu0 0.0
  %81 = vmatpush1.msra.mxu0 0.0
  %82 = vmatprep.subr.mxu0 0.0
  %83 = vmatpush1.msra.mxu0 0.0
  %84 = vmatprep.subr.mxu0 0.0
  %85 = vmatpush1.msra.mxu0 0.0
  %86 = vmatprep.subr.mxu0 0.0
  %87 = vmatpush1.msra.mxu0 0.0
  %88 = vmatprep.subr.mxu0 0.0
  %89 = vmatpush1.msra.mxu0 0.0
  %90 = vmatprep.subr.mxu0 0.0
  %91 = vmatpush1.msra.mxu0 0.0
  %92 = vmatprep.subr.mxu0 0.0
  %93 = vmatpush1.msra.mxu0 0.0
  %94 = vmatprep.subr.mxu0 %v40
  %95 = vmatpush1.msra.mxu0 %v39
  %96 = vmatprep.subr.mxu0 %v38
  %97 = vmatpush1.msra.mxu0 %v37
  %98 = vmatprep.subr.mxu0 %v36
  %99 = vmatpush1.msra.mxu0 %v35
  %100 = vmatprep.subr.mxu0 %v34
  %101 = vmatpush1.msra.mxu0 %v33
  %102 = vmatprep.subr.mxu0 %v32
  %103 = vmatpush1.msra.mxu0 %v31
  %104 = vmatprep.subr.mxu0 %v30
  %105 = vmatpush1.msra.mxu0 %v29
  %106 = vmatprep.subr.mxu0 %v28
  %107 = vmatpush1.msra.mxu0 %v27
  %108 = vmatprep.subr.mxu0 %v26
  %109 = vmatpush1.msra.mxu0 %v25
  %110 = vmatprep.subr.mxu0 0.0
  %111 = vmatpush2.msra.mxu0 0.0
  %112 = vmatprep.subr.mxu0 0.0
  %113 = vmatpush2.msra.mxu0 0.0
  %114 = vmatprep.subr.mxu0 0.0
  %115 = vmatpush2.msra.mxu0 0.0
  %116 = vmatprep.subr.mxu0 0.0
  %117 = vmatpush2.msra.mxu0 0.0
  %118 = vmatprep.subr.mxu0 0.0
  %119 = vmatpush2.msra.mxu0 0.0
  %120 = vmatprep.subr.mxu0 0.0
  %121 = vmatpush2.msra.mxu0 0.0
  %122 = vmatprep.subr.mxu0 0.0
  %123 = vmatpush2.msra.mxu0 0.0
  %124 = vmatprep.subr.mxu0 0.0
  %125 = vmatpush2.msra.mxu0 0.0
  %126 = vmatprep.subr.mxu0 0.0
  %127 = vmatpush2.msra.mxu0 0.0
  %128 = vmatprep.subr.mxu0 0.0
  %129 = vmatpush2.msra.mxu0 0.0
  %130 = vmatprep.subr.mxu0 0.0
  %131 = vmatpush2.msra.mxu0 0.0
  %132 = vmatprep.subr.mxu0 0.0
  %133 = vmatpush2.msra.mxu0 0.0
  %134 = vmatprep.subr.mxu0 0.0
  %135 = vmatpush2.msra.mxu0 0.0
  %136 = vmatprep.subr.mxu0 0.0
  %137 = vmatpush2.msra.mxu0 0.0
  %138 = vmatprep.subr.mxu0 0.0
  %139 = vmatpush2.msra.mxu0 0.0
  %140 = vmatprep.subr.mxu0 0.0
  %141 = vmatpush2.msra.mxu0 0.0
  %142 = vmatprep.mubr.f32.mxu0 0.0
  %143 = vmatmul.mubr.f32.gmra.mxu0 %v55
  %v144 = vpop.f32.mrf.mxu0
  %v145 = vadd.f32 %v46, %v144
  %v146 = vpop.f32.mrf.mxu0
  %v147 = vadd.f32 %v50, %v146
  %148 = vmatprep.mubr.f32.mxu0 0.0
  %149 = vmatmul.mubr.f32.gmra.mxu0 %v58
  %v150 = vpop.f32.mrf.mxu0
  %v151 = vadd.f32 %v46, %v150
  %v152 = vpop.f32.mrf.mxu0
  %v153 = vadd.f32 %v50, %v152
  %154 = vmatprep.mubr.f32.mxu0 0.0
  %155 = vmatmul.mubr.f32.gmra.mxu0 %v61
  %v156 = vpop.f32.mrf.mxu0
  %v157 = vadd.f32 %v46, %v156
  %v158 = vpop.f32.mrf.mxu0
  %v159 = vadd.f32 %v50, %v158
  %160 = vmatprep.mubr.f32.mxu0 0.0
  %161 = vmatmul.mubr.f32.gmra.mxu0 %v64
  %v162 = vpop.f32.mrf.mxu0
  %v163 = vadd.f32 %v46, %v162
  %v164 = vpop.f32.mrf.mxu0
  %v165 = vadd.f32 %v50, %v164
  %166 = vmatprep.mubr.f32.mxu0 0.0
  %167 = vmatmul.mubr.f32.gmra.mxu0 %v67
  %v168 = vpop.f32.mrf.mxu0
  %v169 = vadd.f32 %v46, %v168
  %v170 = vpop.f32.mrf.mxu0
  %v171 = vadd.f32 %v50, %v170
  %172 = vmatprep.mubr.f32.mxu0 0.0
  %173 = vmatmul.mubr.f32.gmra.mxu0 %v70
  %v174 = vpop.f32.mrf.mxu0
  %v175 = vadd.f32 %v46, %v174
  %v176 = vpop.f32.mrf.mxu0
  %v177 = vadd.f32 %v50, %v176
  %178 = vmatprep.mubr.f32.mxu0 0.0
  %179 = vmatmul.mubr.f32.gmra.mxu0 %v73
  %v180 = vpop.f32.mrf.mxu0
  %v181 = vadd.f32 %v46, %v180
  %v182 = vpop.f32.mrf.mxu0
  %v183 = vadd.f32 %v50, %v182
  %184 = vmatprep.mubr.f32.mxu0 0.0
  %185 = vmatmul.mubr.f32.gmra.mxu0 %v76
  %v186 = vpop.f32.mrf.mxu0
  %v187 = vadd.f32 %v46, %v186
  %v188 = vpop.f32.mrf.mxu0
  %v189 = vadd.f32 %v50, %v188
  %190 = vdwg.mxu0
  %191 = vst [vmem:[#allocation2] sm:$0xff] %v145
  %192 = vst [vmem:[#allocation2 + $0x8] sm:$0xff] %v147
  %193 = vst [vmem:[#allocation2 + $0x10] sm:$0xff] %v151
  %194 = vst [vmem:[#allocation2 + $0x18] sm:$0xff] %v153
  %195 = vst [vmem:[#allocation2 + $0x20] sm:$0xff] %v157
  %196 = vst [vmem:[#allocation2 + $0x28] sm:$0xff] %v159
  %197 = vst [vmem:[#allocation2 + $0x30] sm:$0xff] %v163
  %198 = vst [vmem:[#allocation2 + $0x38] sm:$0xff] %v165
  %199 = vst [vmem:[#allocation2 + $0x40] sm:$0xff] %v169
  %200 = vst [vmem:[#allocation2 + $0x48] sm:$0xff] %v171
  %201 = vst [vmem:[#allocation2 + $0x50] sm:$0xff] %v175
  %202 = vst [vmem:[#allocation2 + $0x58] sm:$0xff] %v177
  %203 = vst [vmem:[#allocation2 + $0x60] sm:$0xff] %v181
  %204 = vst [vmem:[#allocation2 + $0x68] sm:$0xff] %v183
  %205 = vst [vmem:[#allocation2 + $0x70] sm:$0xff] %v187
  %206 = vst [vmem:[#allocation2 + $0x78] sm:$0xff] %v189
  %v207 = vld [vmem:[%s3] sm:$0xff]
  %v208 = vld [vmem:[%s3 + $0x8] sm:$0xff]
  %v209 = vld [vmem:[%s3 + $0x10] sm:$0xff]
  %v210 = vld [vmem:[%s3 + $0x18] sm:$0xff]
  %v211 = vld [vmem:[%s3 + $0x20] sm:$0xff]
  %v212 = vld [vmem:[%s3 + $0x28] sm:$0xff]
  %v213 = vld [vmem:[%s3 + $0x30] sm:$0xff]
  %v214 = vld [vmem:[%s3 + $0x38] sm:$0xff]
  %v215 = vld [vmem:[%s3 + $0x40] sm:$0xff]
  %v216 = vld [vmem:[%s3 + $0x48] sm:$0xff]
  %v217 = vld [vmem:[%s3 + $0x50] sm:$0xff]
  %v218 = vld [vmem:[%s3 + $0x58] sm:$0xff]
  %v219 = vld [vmem:[%s3 + $0x60] sm:$0xff]
  %v220 = vld [vmem:[%s3 + $0x68] sm:$0xff]
  %v221 = vld [vmem:[%s3 + $0x70] sm:$0xff]
  %v222 = vld [vmem:[%s3 + $0x78] sm:$0xff]
  %s223 = smul.u32 0, 2
  %s224 = smul.addr %s223, 8
  %s225 = scalar_lea.vmem [#allocation2], %s224
  %v226 = vld [vmem:[%s225] sm:$0xff]
  %v227 = vld [vmem:[%s225 + $0x8] sm:$0xff]
  %v229 = vsel %vm53, 0.0, 0
  %231 = vmatprep.subr.mxu0 0.0
  %232 = vmatpush1.msra.mxu0 0.0
  %233 = vmatprep.subr.mxu0 0.0
  %234 = vmatpush1.msra.mxu0 0.0
  %235 = vmatprep.subr.mxu0 0.0
  %236 = vmatpush1.msra.mxu0 0.0
  %237 = vmatprep.subr.mxu0 0.0
  %238 = vmatpush1.msra.mxu0 0.0
  %239 = vmatprep.subr.mxu0 0.0
  %240 = vmatpush1.msra.mxu0 0.0
  %241 = vmatprep.subr.mxu0 0.0
  %242 = vmatpush1.msra.mxu0 0.0
  %243 = vmatprep.subr.mxu0 0.0
  %244 = vmatpush1.msra.mxu0 0.0
  %245 = vmatprep.subr.mxu0 0.0
  %246 = vmatpush1.msra.mxu0 0.0
  %247 = vmatprep.subr.mxu0 %v222
  %248 = vmatpush1.msra.mxu0 %v221
  %249 = vmatprep.subr.mxu0 %v220
  %250 = vmatpush1.msra.mxu0 %v219
  %251 = vmatprep.subr.mxu0 %v218
  %252 = vmatpush1.msra.mxu0 %v217
  %253 = vmatprep.subr.mxu0 %v216
  %254 = vmatpush1.msra.mxu0 %v215
  %255 = vmatprep.subr.mxu0 %v214
  %256 = vmatpush1.msra.mxu0 %v213
  %257 = vmatprep.subr.mxu0 %v212
  %258 = vmatpush1.msra.mxu0 %v211
  %259 = vmatprep.subr.mxu0 %v210
  %260 = vmatpush1.msra.mxu0 %v209
  %261 = vmatprep.subr.mxu0 %v208
  %262 = vmatpush1.msra.mxu0 %v207
  %263 = vmatprep.subr.mxu0 0.0
  %264 = vmatpush2.msra.mxu0 0.0
  %265 = vmatprep.subr.mxu0 0.0
  %266 = vmatpush2.msra.mxu0 0.0
  %267 = vmatprep.subr.mxu0 0.0
  %268 = vmatpush2.msra.mxu0 0.0
  %269 = vmatprep.subr.mxu0 0.0
  %270 = vmatpush2.msra.mxu0 0.0
  %271 = vmatprep.subr.mxu0 0.0
  %272 = vmatpush2.msra.mxu0 0.0
  %273 = vmatprep.subr.mxu0 0.0
  %274 = vmatpush2.msra.mxu0 0.0
  %275 = vmatprep.subr.mxu0 0.0
  %276 = vmatpush2.msra.mxu0 0.0
  %277 = vmatprep.subr.mxu0 0.0
  %278 = vmatpush2.msra.mxu0 0.0
  %279 = vmatprep.subr.mxu0 0.0
  %280 = vmatpush2.msra.mxu0 0.0
  %281 = vmatprep.subr.mxu0 0.0
  %282 = vmatpush2.msra.mxu0 0.0
  %283 = vmatprep.subr.mxu0 0.0
  %284 = vmatpush2.msra.mxu0 0.0
  %285 = vmatprep.subr.mxu0 0.0
  %286 = vmatpush2.msra.mxu0 0.0
  %287 = vmatprep.subr.mxu0 0.0
  %288 = vmatpush2.msra.mxu0 0.0
  %289 = vmatprep.subr.mxu0 0.0
  %290 = vmatpush2.msra.mxu0 0.0
  %291 = vmatprep.subr.mxu0 0.0
  %292 = vmatpush2.msra.mxu0 0.0
  %293 = vmatprep.subr.mxu0 0.0
  %294 = vmatpush2.msra.mxu0 0.0
  %295 = vmatprep.mubr.f32.mxu0 0.0
  %296 = vmatmul.mubr.f32.gmra.mxu0 %v229
  %v297 = vpop.f32.mrf.mxu0
  %v298 = vadd.f32 0.0, %v297
  %v299 = vpop.f32.mrf.mxu0
  %v300 = vadd.f32 0.0, %v299
  %301 = vdwg.mxu0
  %v302 = vadd.f32 %v226, %v298
  %v303 = vadd.f32 %v227, %v300
  %v304 = vxor.u32 %v302, 2147483648
  %v305 = vxor.u32 %v303, 2147483648
  %v306 = vmul.f32 %v304, 1.442695
  %v307 = vpow.pop %v306
  %v308 = vmul.f32 %v305, 1.442695
  %v309 = vpow.pop %v308
  %v310 = vadd.f32 %v307, 1.0
  %v311 = vadd.f32 %v309, 1.0
  %v312 = vrcp.pop %v310
  %v313 = vmul.f32 1.0, %v312
  %v314 = vrcp.pop %v311
  %v315 = vmul.f32 1.0, %v314
  %v316 = vtanh.pop %v303
  %v317 = vmul.f32 %v313, 0.0
  %319 = vrot.lane.b32.xlu0 %v316, 64
  %v320 = vpop.permute.xlu0 %319
  %v322 = vmul.f32 %v313, %v320
  %324 = vrot.lane.b32.xlu0 %v322, 64
  %v325 = vpop.permute.xlu0 %324
  %v327 = vadd.f32 %v317, %v325
  %v328 = vtanh.pop %v327
  %330 = vrot.lane.b32.xlu0 %v328, 64
  %v331 = vpop.permute.xlu0 %330
  %v333 = vmul.f32 %v315, %v331
  %334 = vst.msk [vmem:[%s4] sm:$0xff] %vm53, %v333
  %s335 = smul.u32 1, 2
  %s336 = smul.addr %s335, 8
  %s337 = scalar_lea.vmem [#allocation2], %s336
  %v338 = vld [vmem:[%s337] sm:$0xff]
  %v339 = vld [vmem:[%s337 + $0x8] sm:$0xff]
  %v341 = vsel %vm53, %v333, 0
  %343 = vmatprep.subr.mxu0 0.0
  %344 = vmatpush1.msra.mxu0 0.0
  %345 = vmatprep.subr.mxu0 0.0
  %346 = vmatpush1.msra.mxu0 0.0
  %347 = vmatprep.subr.mxu0 0.0
  %348 = vmatpush1.msra.mxu0 0.0
  %349 = vmatprep.subr.mxu0 0.0
  %350 = vmatpush1.msra.mxu0 0.0
  %351 = vmatprep.subr.mxu0 0.0
  %352 = vmatpush1.msra.mxu0 0.0
  %353 = vmatprep.subr.mxu0 0.0
  %354 = vmatpush1.msra.mxu0 0.0
  %355 = vmatprep.subr.mxu0 0.0
  %356 = vmatpush1.msra.mxu0 0.0
  %357 = vmatprep.subr.mxu0 0.0
  %358 = vmatpush1.msra.mxu0 0.0
  %359 = vmatprep.subr.mxu0 %v222
  %360 = vmatpush1.msra.mxu0 %v221
  %361 = vmatprep.subr.mxu0 %v220
  %362 = vmatpush1.msra.mxu0 %v219
  %363 = vmatprep.subr.mxu0 %v218
  %364 = vmatpush1.msra.mxu0 %v217
  %365 = vmatprep.subr.mxu0 %v216
  %366 = vmatpush1.msra.mxu0 %v215
  %367 = vmatprep.subr.mxu0 %v214
  %368 = vmatpush1.msra.mxu0 %v213
  %369 = vmatprep.subr.mxu0 %v212
  %370 = vmatpush1.msra.mxu0 %v211
  %371 = vmatprep.subr.mxu0 %v210
  %372 = vmatpush1.msra.mxu0 %v209
  %373 = vmatprep.subr.mxu0 %v208
  %374 = vmatpush1.msra.mxu0 %v207
  %375 = vmatprep.subr.mxu0 0.0
  %376 = vmatpush2.msra.mxu0 0.0
  %377 = vmatprep.subr.mxu0 0.0
  %378 = vmatpush2.msra.mxu0 0.0
  %379 = vmatprep.subr.mxu0 0.0
  %380 = vmatpush2.msra.mxu0 0.0
  %381 = vmatprep.subr.mxu0 0.0
  %382 = vmatpush2.msra.mxu0 0.0
  %383 = vmatprep.subr.mxu0 0.0
  %384 = vmatpush2.msra.mxu0 0.0
  %385 = vmatprep.subr.mxu0 0.0
  %386 = vmatpush2.msra.mxu0 0.0
  %387 = vmatprep.subr.mxu0 0.0
  %388 = vmatpush2.msra.mxu0 0.0
  %389 = vmatprep.subr.mxu0 0.0
  %390 = vmatpush2.msra.mxu0 0.0
  %391 = vmatprep.subr.mxu0 0.0
  %392 = vmatpush2.msra.mxu0 0.0
  %393 = vmatprep.subr.mxu0 0.0
  %394 = vmatpush2.msra.mxu0 0.0
  %395 = vmatprep.subr.mxu0 0.0
  %396 = vmatpush2.msra.mxu0 0.0
  %397 = vmatprep.subr.mxu0 0.0
  %398 = vmatpush2.msra.mxu0 0.0
  %399 = vmatprep.subr.mxu0 0.0
  %400 = vmatpush2.msra.mxu0 0.0
  %401 = vmatprep.subr.mxu0 0.0
  %402 = vmatpush2.msra.mxu0 0.0
  %403 = vmatprep.subr.mxu0 0.0
  %404 = vmatpush2.msra.mxu0 0.0
  %405 = vmatprep.subr.mxu0 0.0
  %406 = vmatpush2.msra.mxu0 0.0
  %407 = vmatprep.mubr.f32.mxu0 0.0
  %408 = vmatmul.mubr.f32.gmra.mxu0 %v341
  %v409 = vpop.f32.mrf.mxu0
  %v410 = vadd.f32 0.0, %v409
  %v411 = vpop.f32.mrf.mxu0
  %v412 = vadd.f32 0.0, %v411
  %413 = vdwg.mxu0
  %v414 = vadd.f32 %v338, %v410
  %v415 = vadd.f32 %v339, %v412
  %v416 = vxor.u32 %v414, 2147483648
  %v417 = vxor.u32 %v415, 2147483648
  %v418 = vmul.f32 %v416, 1.442695
  %v419 = vpow.pop %v418
  %v420 = vmul.f32 %v417, 1.442695
  %v421 = vpow.pop %v420
  %v422 = vadd.f32 %v419, 1.0
  %v423 = vadd.f32 %v421, 1.0
  %v424 = vrcp.pop %v422
  %v425 = vmul.f32 1.0, %v424
  %v426 = vrcp.pop %v423
  %v427 = vmul.f32 1.0, %v426
  %v428 = vtanh.pop %v415
  %v429 = vmul.f32 %v425, %v327
  %431 = vrot.lane.b32.xlu0 %v428, 64
  %v432 = vpop.permute.xlu0 %431
  %v434 = vmul.f32 %v425, %v432
  %436 = vrot.lane.b32.xlu0 %v434, 64
  %v437 = vpop.permute.xlu0 %436
  %v439 = vadd.f32 %v429, %v437
  %v440 = vtanh.pop %v439
  %442 = vrot.lane.b32.xlu0 %v440, 64
  %v443 = vpop.permute.xlu0 %442
  %v445 = vmul.f32 %v427, %v443
  %s446 = scalar_lea.vmem %s4, 8
  %447 = vst.msk [vmem:[%s446] sm:$0xff] %vm53, %v445
  %s448 = smul.u32 2, 2
  %s449 = smul.addr %s448, 8
  %s450 = scalar_lea.vmem [#allocation2], %s449
  %v451 = vld [vmem:[%s450] sm:$0xff]
  %v452 = vld [vmem:[%s450 + $0x8] sm:$0xff]
  %v454 = vsel %vm53, %v445, 0
  %456 = vmatprep.subr.mxu0 0.0
  %457 = vmatpush1.msra.mxu0 0.0
  %458 = vmatprep.subr.mxu0 0.0
  %459 = vmatpush1.msra.mxu0 0.0
  %460 = vmatprep.subr.mxu0 0.0
  %461 = vmatpush1.msra.mxu0 0.0
  %462 = vmatprep.subr.mxu0 0.0
  %463 = vmatpush1.msra.mxu0 0.0
  %464 = vmatprep.subr.mxu0 0.0
  %465 = vmatpush1.msra.mxu0 0.0
  %466 = vmatprep.subr.mxu0 0.0
  %467 = vmatpush1.msra.mxu0 0.0
  %468 = vmatprep.subr.mxu0 0.0
  %469 = vmatpush1.msra.mxu0 0.0
  %470 = vmatprep.subr.mxu0 0.0
  %471 = vmatpush1.msra.mxu0 0.0
  %472 = vmatprep.subr.mxu0 %v222
  %473 = vmatpush1.msra.mxu0 %v221
  %474 = vmatprep.subr.mxu0 %v220
  %475 = vmatpush1.msra.mxu0 %v219
  %476 = vmatprep.subr.mxu0 %v218
  %477 = vmatpush1.msra.mxu0 %v217
  %478 = vmatprep.subr.mxu0 %v216
  %479 = vmatpush1.msra.mxu0 %v215
  %480 = vmatprep.subr.mxu0 %v214
  %481 = vmatpush1.msra.mxu0 %v213
  %482 = vmatprep.subr.mxu0 %v212
  %483 = vmatpush1.msra.mxu0 %v211
  %484 = vmatprep.subr.mxu0 %v210
  %485 = vmatpush1.msra.mxu0 %v209
  %486 = vmatprep.subr.mxu0 %v208
  %487 = vmatpush1.msra.mxu0 %v207
  %488 = vmatprep.subr.mxu0 0.0
  %489 = vmatpush2.msra.mxu0 0.0
  %490 = vmatprep.subr.mxu0 0.0
  %491 = vmatpush2.msra.mxu0 0.0
  %492 = vmatprep.subr.mxu0 0.0
  %493 = vmatpush2.msra.mxu0 0.0
  %494 = vmatprep.subr.mxu0 0.0
  %495 = vmatpush2.msra.mxu0 0.0
  %496 = vmatprep.subr.mxu0 0.0
  %497 = vmatpush2.msra.mxu0 0.0
  %498 = vmatprep.subr.mxu0 0.0
  %499 = vmatpush2.msra.mxu0 0.0
  %500 = vmatprep.subr.mxu0 0.0
  %501 = vmatpush2.msra.mxu0 0.0
  %502 = vmatprep.subr.mxu0 0.0
  %503 = vmatpush2.msra.mxu0 0.0
  %504 = vmatprep.subr.mxu0 0.0
  %505 = vmatpush2.msra.mxu0 0.0
  %506 = vmatprep.subr.mxu0 0.0
  %507 = vmatpush2.msra.mxu0 0.0
  %508 = vmatprep.subr.mxu0 0.0
  %509 = vmatpush2.msra.mxu0 0.0
  %510 = vmatprep.subr.mxu0 0.0
  %511 = vmatpush2.msra.mxu0 0.0
  %512 = vmatprep.subr.mxu0 0.0
  %513 = vmatpush2.msra.mxu0 0.0
  %514 = vmatprep.subr.mxu0 0.0
  %515 = vmatpush2.msra.mxu0 0.0
  %516 = vmatprep.subr.mxu0 0.0
  %517 = vmatpush2.msra.mxu0 0.0
  %518 = vmatprep.subr.mxu0 0.0
  %519 = vmatpush2.msra.mxu0 0.0
  %520 = vmatprep.mubr.f32.mxu0 0.0
  %521 = vmatmul.mubr.f32.gmra.mxu0 %v454
  %v522 = vpop.f32.mrf.mxu0
  %v523 = vadd.f32 0.0, %v522
  %v524 = vpop.f32.mrf.mxu0
  %v525 = vadd.f32 0.0, %v524
  %526 = vdwg.mxu0
  %v527 = vadd.f32 %v451, %v523
  %v528 = vadd.f32 %v452, %v525
  %v529 = vxor.u32 %v527, 2147483648
  %v530 = vxor.u32 %v528, 2147483648
  %v531 = vmul.f32 %v529, 1.442695
  %v532 = vpow.pop %v531
  %v533 = vmul.f32 %v530, 1.442695
  %v534 = vpow.pop %v533
  %v535 = vadd.f32 %v532, 1.0
  %v536 = vadd.f32 %v534, 1.0
  %v537 = vrcp.pop %v535
  %v538 = vmul.f32 1.0, %v537
  %v539 = vrcp.pop %v536
  %v540 = vmul.f32 1.0, %v539
  %v541 = vtanh.pop %v528
  %v542 = vmul.f32 %v538, %v439
  %544 = vrot.lane.b32.xlu0 %v541, 64
  %v545 = vpop.permute.xlu0 %544
  %v547 = vmul.f32 %v538, %v545
  %549 = vrot.lane.b32.xlu0 %v547, 64
  %v550 = vpop.permute.xlu0 %549
  %v552 = vadd.f32 %v542, %v550
  %v553 = vtanh.pop %v552
  %555 = vrot.lane.b32.xlu0 %v553, 64
  %v556 = vpop.permute.xlu0 %555
  %v558 = vmul.f32 %v540, %v556
  %s559 = scalar_lea.vmem %s4, 16
  %560 = vst.msk [vmem:[%s559] sm:$0xff] %vm53, %v558
  %s561 = smul.u32 3, 2
  %s562 = smul.addr %s561, 8
  %s563 = scalar_lea.vmem [#allocation2], %s562
  %v564 = vld [vmem:[%s563] sm:$0xff]
  %v565 = vld [vmem:[%s563 + $0x8] sm:$0xff]
  %v567 = vsel %vm53, %v558, 0
  %569 = vmatprep.subr.mxu0 0.0
  %570 = vmatpush1.msra.mxu0 0.0
  %571 = vmatprep.subr.mxu0 0.0
  %572 = vmatpush1.msra.mxu0 0.0
  %573 = vmatprep.subr.mxu0 0.0
  %574 = vmatpush1.msra.mxu0 0.0
  %575 = vmatprep.subr.mxu0 0.0
  %576 = vmatpush1.msra.mxu0 0.0
  %577 = vmatprep.subr.mxu0 0.0
  %578 = vmatpush1.msra.mxu0 0.0
  %579 = vmatprep.subr.mxu0 0.0
  %580 = vmatpush1.msra.mxu0 0.0
  %581 = vmatprep.subr.mxu0 0.0
  %582 = vmatpush1.msra.mxu0 0.0
  %583 = vmatprep.subr.mxu0 0.0
  %584 = vmatpush1.msra.mxu0 0.0
  %585 = vmatprep.subr.mxu0 %v222
  %586 = vmatpush1.msra.mxu0 %v221
  %587 = vmatprep.subr.mxu0 %v220
  %588 = vmatpush1.msra.mxu0 %v219
  %589 = vmatprep.subr.mxu0 %v218
  %590 = vmatpush1.msra.mxu0 %v217
  %591 = vmatprep.subr.mxu0 %v216
  %592 = vmatpush1.msra.mxu0 %v215
  %593 = vmatprep.subr.mxu0 %v214
  %594 = vmatpush1.msra.mxu0 %v213
  %595 = vmatprep.subr.mxu0 %v212
  %596 = vmatpush1.msra.mxu0 %v211
  %597 = vmatprep.subr.mxu0 %v210
  %598 = vmatpush1.msra.mxu0 %v209
  %599 = vmatprep.subr.mxu0 %v208
  %600 = vmatpush1.msra.mxu0 %v207
  %601 = vmatprep.subr.mxu0 0.0
  %602 = vmatpush2.msra.mxu0 0.0
  %603 = vmatprep.subr.mxu0 0.0
  %604 = vmatpush2.msra.mxu0 0.0
  %605 = vmatprep.subr.mxu0 0.0
  %606 = vmatpush2.msra.mxu0 0.0
  %607 = vmatprep.subr.mxu0 0.0
  %608 = vmatpush2.msra.mxu0 0.0
  %609 = vmatprep.subr.mxu0 0.0
  %610 = vmatpush2.msra.mxu0 0.0
  %611 = vmatprep.subr.mxu0 0.0
  %612 = vmatpush2.msra.mxu0 0.0
  %613 = vmatprep.subr.mxu0 0.0
  %614 = vmatpush2.msra.mxu0 0.0
  %615 = vmatprep.subr.mxu0 0.0
  %616 = vmatpush2.msra.mxu0 0.0
  %617 = vmatprep.subr.mxu0 0.0
  %618 = vmatpush2.msra.mxu0 0.0
  %619 = vmatprep.subr.mxu0 0.0
  %620 = vmatpush2.msra.mxu0 0.0
  %621 = vmatprep.subr.mxu0 0.0
  %622 = vmatpush2.msra.mxu0 0.0
  %623 = vmatprep.subr.mxu0 0.0
  %624 = vmatpush2.msra.mxu0 0.0
  %625 = vmatprep.subr.mxu0 0.0
  %626 = vmatpush2.msra.mxu0 0.0
  %627 = vmatprep.subr.mxu0 0.0
  %628 = vmatpush2.msra.mxu0 0.0
  %629 = vmatprep.subr.mxu0 0.0
  %630 = vmatpush2.msra.mxu0 0.0
  %631 = vmatprep.subr.mxu0 0.0
  %632 = vmatpush2.msra.mxu0 0.0
  %633 = vmatprep.mubr.f32.mxu0 0.0
  %634 = vmatmul.mubr.f32.gmra.mxu0 %v567
  %v635 = vpop.f32.mrf.mxu0
  %v636 = vadd.f32 0.0, %v635
  %v637 = vpop.f32.mrf.mxu0
  %v638 = vadd.f32 0.0, %v637
  %639 = vdwg.mxu0
  %v640 = vadd.f32 %v564, %v636
  %v641 = vadd.f32 %v565, %v638
  %v642 = vxor.u32 %v640, 2147483648
  %v643 = vxor.u32 %v641, 2147483648
  %v644 = vmul.f32 %v642, 1.442695
  %v645 = vpow.pop %v644
  %v646 = vmul.f32 %v643, 1.442695
  %v647 = vpow.pop %v646
  %v648 = vadd.f32 %v645, 1.0
  %v649 = vadd.f32 %v647, 1.0
  %v650 = vrcp.pop %v648
  %v651 = vmul.f32 1.0, %v650
  %v652 = vrcp.pop %v649
  %v653 = vmul.f32 1.0, %v652
  %v654 = vtanh.pop %v641
  %v655 = vmul.f32 %v651, %v552
  %657 = vrot.lane.b32.xlu0 %v654, 64
  %v658 = vpop.permute.xlu0 %657
  %v660 = vmul.f32 %v651, %v658
  %662 = vrot.lane.b32.xlu0 %v660, 64
  %v663 = vpop.permute.xlu0 %662
  %v665 = vadd.f32 %v655, %v663
  %v666 = vtanh.pop %v665
  %668 = vrot.lane.b32.xlu0 %v666, 64
  %v669 = vpop.permute.xlu0 %668
  %v671 = vmul.f32 %v653, %v669
  %s672 = scalar_lea.vmem %s4, 24
  %673 = vst.msk [vmem:[%s672] sm:$0xff] %vm53, %v671
  %s674 = smul.u32 4, 2
  %s675 = smul.addr %s674, 8
  %s676 = scalar_lea.vmem [#allocation2], %s675
  %v677 = vld [vmem:[%s676] sm:$0xff]
  %v678 = vld [vmem:[%s676 + $0x8] sm:$0xff]
  %v680 = vsel %vm53, %v671, 0
  %682 = vmatprep.subr.mxu0 0.0
  %683 = vmatpush1.msra.mxu0 0.0
  %684 = vmatprep.subr.mxu0 0.0
  %685 = vmatpush1.msra.mxu0 0.0
  %686 = vmatprep.subr.mxu0 0.0
  %687 = vmatpush1.msra.mxu0 0.0
  %688 = vmatprep.subr.mxu0 0.0
  %689 = vmatpush1.msra.mxu0 0.0
  %690 = vmatprep.subr.mxu0 0.0
  %691 = vmatpush1.msra.mxu0 0.0
  %692 = vmatprep.subr.mxu0 0.0
  %693 = vmatpush1.msra.mxu0 0.0
  %694 = vmatprep.subr.mxu0 0.0
  %695 = vmatpush1.msra.mxu0 0.0
  %696 = vmatprep.subr.mxu0 0.0
  %697 = vmatpush1.msra.mxu0 0.0
  %698 = vmatprep.subr.mxu0 %v222
  %699 = vmatpush1.msra.mxu0 %v221
  %700 = vmatprep.subr.mxu0 %v220
  %701 = vmatpush1.msra.mxu0 %v219
  %702 = vmatprep.subr.mxu0 %v218
  %703 = vmatpush1.msra.mxu0 %v217
  %704 = vmatprep.subr.mxu0 %v216
  %705 = vmatpush1.msra.mxu0 %v215
  %706 = vmatprep.subr.mxu0 %v214
  %707 = vmatpush1.msra.mxu0 %v213
  %708 = vmatprep.subr.mxu0 %v212
  %709 = vmatpush1.msra.mxu0 %v211
  %710 = vmatprep.subr.mxu0 %v210
  %711 = vmatpush1.msra.mxu0 %v209
  %712 = vmatprep.subr.mxu0 %v208
  %713 = vmatpush1.msra.mxu0 %v207
  %714 = vmatprep.subr.mxu0 0.0
  %715 = vmatpush2.msra.mxu0 0.0
  %716 = vmatprep.subr.mxu0 0.0
  %717 = vmatpush2.msra.mxu0 0.0
  %718 = vmatprep.subr.mxu0 0.0
  %719 = vmatpush2.msra.mxu0 0.0
  %720 = vmatprep.subr.mxu0 0.0
  %721 = vmatpush2.msra.mxu0 0.0
  %722 = vmatprep.subr.mxu0 0.0
  %723 = vmatpush2.msra.mxu0 0.0
  %724 = vmatprep.subr.mxu0 0.0
  %725 = vmatpush2.msra.mxu0 0.0
  %726 = vmatprep.subr.mxu0 0.0
  %727 = vmatpush2.msra.mxu0 0.0
  %728 = vmatprep.subr.mxu0 0.0
  %729 = vmatpush2.msra.mxu0 0.0
  %730 = vmatprep.subr.mxu0 0.0
  %731 = vmatpush2.msra.mxu0 0.0
  %732 = vmatprep.subr.mxu0 0.0
  %733 = vmatpush2.msra.mxu0 0.0
  %734 = vmatprep.subr.mxu0 0.0
  %735 = vmatpush2.msra.mxu0 0.0
  %736 = vmatprep.subr.mxu0 0.0
  %737 = vmatpush2.msra.mxu0 0.0
  %738 = vmatprep.subr.mxu0 0.0
  %739 = vmatpush2.msra.mxu0 0.0
  %740 = vmatprep.subr.mxu0 0.0
  %741 = vmatpush2.msra.mxu0 0.0
  %742 = vmatprep.subr.mxu0 0.0
  %743 = vmatpush2.msra.mxu0 0.0
  %744 = vmatprep.subr.mxu0 0.0
  %745 = vmatpush2.msra.mxu0 0.0
  %746 = vmatprep.mubr.f32.mxu0 0.0
  %747 = vmatmul.mubr.f32.gmra.mxu0 %v680
  %v748 = vpop.f32.mrf.mxu0
  %v749 = vadd.f32 0.0, %v748
  %v750 = vpop.f32.mrf.mxu0
  %v751 = vadd.f32 0.0, %v750
  %752 = vdwg.mxu0
  %v753 = vadd.f32 %v677, %v749
  %v754 = vadd.f32 %v678, %v751
  %v755 = vxor.u32 %v753, 2147483648
  %v756 = vxor.u32 %v754, 2147483648
  %v757 = vmul.f32 %v755, 1.442695
  %v758 = vpow.pop %v757
  %v759 = vmul.f32 %v756, 1.442695
  %v760 = vpow.pop %v759
  %v761 = vadd.f32 %v758, 1.0
  %v762 = vadd.f32 %v760, 1.0
  %v763 = vrcp.pop %v761
  %v764 = vmul.f32 1.0, %v763
  %v765 = vrcp.pop %v762
  %v766 = vmul.f32 1.0, %v765
  %v767 = vtanh.pop %v754
  %v768 = vmul.f32 %v764, %v665
  %770 = vrot.lane.b32.xlu0 %v767, 64
  %v771 = vpop.permute.xlu0 %770
  %v773 = vmul.f32 %v764, %v771
  %775 = vrot.lane.b32.xlu0 %v773, 64
  %v776 = vpop.permute.xlu0 %775
  %v778 = vadd.f32 %v768, %v776
  %v779 = vtanh.pop %v778
  %781 = vrot.lane.b32.xlu0 %v779, 64
  %v782 = vpop.permute.xlu0 %781
  %v784 = vmul.f32 %v766, %v782
  %s785 = scalar_lea.vmem %s4, 32
  %786 = vst.msk [vmem:[%s785] sm:$0xff] %vm53, %v784
  %s787 = smul.u32 5, 2
  %s788 = smul.addr %s787, 8
  %s789 = scalar_lea.vmem [#allocation2], %s788
  %v790 = vld [vmem:[%s789] sm:$0xff]
  %v791 = vld [vmem:[%s789 + $0x8] sm:$0xff]
  %v793 = vsel %vm53, %v784, 0
  %795 = vmatprep.subr.mxu0 0.0
  %796 = vmatpush1.msra.mxu0 0.0
  %797 = vmatprep.subr.mxu0 0.0
  %798 = vmatpush1.msra.mxu0 0.0
  %799 = vmatprep.subr.mxu0 0.0
  %800 = vmatpush1.msra.mxu0 0.0
  %801 = vmatprep.subr.mxu0 0.0
  %802 = vmatpush1.msra.mxu0 0.0
  %803 = vmatprep.subr.mxu0 0.0
  %804 = vmatpush1.msra.mxu0 0.0
  %805 = vmatprep.subr.mxu0 0.0
  %806 = vmatpush1.msra.mxu0 0.0
  %807 = vmatprep.subr.mxu0 0.0
  %808 = vmatpush1.msra.mxu0 0.0
  %809 = vmatprep.subr.mxu0 0.0
  %810 = vmatpush1.msra.mxu0 0.0
  %811 = vmatprep.subr.mxu0 %v222
  %812 = vmatpush1.msra.mxu0 %v221
  %813 = vmatprep.subr.mxu0 %v220
  %814 = vmatpush1.msra.mxu0 %v219
  %815 = vmatprep.subr.mxu0 %v218
  %816 = vmatpush1.msra.mxu0 %v217
  %817 = vmatprep.subr.mxu0 %v216
  %818 = vmatpush1.msra.mxu0 %v215
  %819 = vmatprep.subr.mxu0 %v214
  %820 = vmatpush1.msra.mxu0 %v213
  %821 = vmatprep.subr.mxu0 %v212
  %822 = vmatpush1.msra.mxu0 %v211
  %823 = vmatprep.subr.mxu0 %v210
  %824 = vmatpush1.msra.mxu0 %v209
  %825 = vmatprep.subr.mxu0 %v208
  %826 = vmatpush1.msra.mxu0 %v207
  %827 = vmatprep.subr.mxu0 0.0
  %828 = vmatpush2.msra.mxu0 0.0
  %829 = vmatprep.subr.mxu0 0.0
  %830 = vmatpush2.msra.mxu0 0.0
  %831 = vmatprep.subr.mxu0 0.0
  %832 = vmatpush2.msra.mxu0 0.0
  %833 = vmatprep.subr.mxu0 0.0
  %834 = vmatpush2.msra.mxu0 0.0
  %835 = vmatprep.subr.mxu0 0.0
  %836 = vmatpush2.msra.mxu0 0.0
  %837 = vmatprep.subr.mxu0 0.0
  %838 = vmatpush2.msra.mxu0 0.0
  %839 = vmatprep.subr.mxu0 0.0
  %840 = vmatpush2.msra.mxu0 0.0
  %841 = vmatprep.subr.mxu0 0.0
  %842 = vmatpush2.msra.mxu0 0.0
  %843 = vmatprep.subr.mxu0 0.0
  %844 = vmatpush2.msra.mxu0 0.0
  %845 = vmatprep.subr.mxu0 0.0
  %846 = vmatpush2.msra.mxu0 0.0
  %847 = vmatprep.subr.mxu0 0.0
  %848 = vmatpush2.msra.mxu0 0.0
  %849 = vmatprep.subr.mxu0 0.0
  %850 = vmatpush2.msra.mxu0 0.0
  %851 = vmatprep.subr.mxu0 0.0
  %852 = vmatpush2.msra.mxu0 0.0
  %853 = vmatprep.subr.mxu0 0.0
  %854 = vmatpush2.msra.mxu0 0.0
  %855 = vmatprep.subr.mxu0 0.0
  %856 = vmatpush2.msra.mxu0 0.0
  %857 = vmatprep.subr.mxu0 0.0
  %858 = vmatpush2.msra.mxu0 0.0
  %859 = vmatprep.mubr.f32.mxu0 0.0
  %860 = vmatmul.mubr.f32.gmra.mxu0 %v793
  %v861 = vpop.f32.mrf.mxu0
  %v862 = vadd.f32 0.0, %v861
  %v863 = vpop.f32.mrf.mxu0
  %v864 = vadd.f32 0.0, %v863
  %865 = vdwg.mxu0
  %v866 = vadd.f32 %v790, %v862
  %v867 = vadd.f32 %v791, %v864
  %v868 = vxor.u32 %v866, 2147483648
  %v869 = vxor.u32 %v867, 2147483648
  %v870 = vmul.f32 %v868, 1.442695
  %v871 = vpow.pop %v870
  %v872 = vmul.f32 %v869, 1.442695
  %v873 = vpow.pop %v872
  %v874 = vadd.f32 %v871, 1.0
  %v875 = vadd.f32 %v873, 1.0
  %v876 = vrcp.pop %v874
  %v877 = vmul.f32 1.0, %v876
  %v878 = vrcp.pop %v875
  %v879 = vmul.f32 1.0, %v878
  %v880 = vtanh.pop %v867
  %v881 = vmul.f32 %v877, %v778
  %883 = vrot.lane.b32.xlu0 %v880, 64
  %v884 = vpop.permute.xlu0 %883
  %v886 = vmul.f32 %v877, %v884
  %888 = vrot.lane.b32.xlu0 %v886, 64
  %v889 = vpop.permute.xlu0 %888
  %v891 = vadd.f32 %v881, %v889
  %v892 = vtanh.pop %v891
  %894 = vrot.lane.b32.xlu0 %v892, 64
  %v895 = vpop.permute.xlu0 %894
  %v897 = vmul.f32 %v879, %v895
  %s898 = scalar_lea.vmem %s4, 40
  %899 = vst.msk [vmem:[%s898] sm:$0xff] %vm53, %v897
  %s900 = smul.u32 6, 2
  %s901 = smul.addr %s900, 8
  %s902 = scalar_lea.vmem [#allocation2], %s901
  %v903 = vld [vmem:[%s902] sm:$0xff]
  %v904 = vld [vmem:[%s902 + $0x8] sm:$0xff]
  %v906 = vsel %vm53, %v897, 0
  %908 = vmatprep.subr.mxu0 0.0
  %909 = vmatpush1.msra.mxu0 0.0
  %910 = vmatprep.subr.mxu0 0.0
  %911 = vmatpush1.msra.mxu0 0.0
  %912 = vmatprep.subr.mxu0 0.0
  %913 = vmatpush1.msra.mxu0 0.0
  %914 = vmatprep.subr.mxu0 0.0
  %915 = vmatpush1.msra.mxu0 0.0
  %916 = vmatprep.subr.mxu0 0.0
  %917 = vmatpush1.msra.mxu0 0.0
  %918 = vmatprep.subr.mxu0 0.0
  %919 = vmatpush1.msra.mxu0 0.0
  %920 = vmatprep.subr.mxu0 0.0
  %921 = vmatpush1.msra.mxu0 0.0
  %922 = vmatprep.subr.mxu0 0.0
  %923 = vmatpush1.msra.mxu0 0.0
  %924 = vmatprep.subr.mxu0 %v222
  %925 = vmatpush1.msra.mxu0 %v221
  %926 = vmatprep.subr.mxu0 %v220
  %927 = vmatpush1.msra.mxu0 %v219
  %928 = vmatprep.subr.mxu0 %v218
  %929 = vmatpush1.msra.mxu0 %v217
  %930 = vmatprep.subr.mxu0 %v216
  %931 = vmatpush1.msra.mxu0 %v215
  %932 = vmatprep.subr.mxu0 %v214
  %933 = vmatpush1.msra.mxu0 %v213
  %934 = vmatprep.subr.mxu0 %v212
  %935 = vmatpush1.msra.mxu0 %v211
  %936 = vmatprep.subr.mxu0 %v210
  %937 = vmatpush1.msra.mxu0 %v209
  %938 = vmatprep.subr.mxu0 %v208
  %939 = vmatpush1.msra.mxu0 %v207
  %940 = vmatprep.subr.mxu0 0.0
  %941 = vmatpush2.msra.mxu0 0.0
  %942 = vmatprep.subr.mxu0 0.0
  %943 = vmatpush2.msra.mxu0 0.0
  %944 = vmatprep.subr.mxu0 0.0
  %945 = vmatpush2.msra.mxu0 0.0
  %946 = vmatprep.subr.mxu0 0.0
  %947 = vmatpush2.msra.mxu0 0.0
  %948 = vmatprep.subr.mxu0 0.0
  %949 = vmatpush2.msra.mxu0 0.0
  %950 = vmatprep.subr.mxu0 0.0
  %951 = vmatpush2.msra.mxu0 0.0
  %952 = vmatprep.subr.mxu0 0.0
  %953 = vmatpush2.msra.mxu0 0.0
  %954 = vmatprep.subr.mxu0 0.0
  %955 = vmatpush2.msra.mxu0 0.0
  %956 = vmatprep.subr.mxu0 0.0
  %957 = vmatpush2.msra.mxu0 0.0
  %958 = vmatprep.subr.mxu0 0.0
  %959 = vmatpush2.msra.mxu0 0.0
  %960 = vmatprep.subr.mxu0 0.0
  %961 = vmatpush2.msra.mxu0 0.0
  %962 = vmatprep.subr.mxu0 0.0
  %963 = vmatpush2.msra.mxu0 0.0
  %964 = vmatprep.subr.mxu0 0.0
  %965 = vmatpush2.msra.mxu0 0.0
  %966 = vmatprep.subr.mxu0 0.0
  %967 = vmatpush2.msra.mxu0 0.0
  %968 = vmatprep.subr.mxu0 0.0
  %969 = vmatpush2.msra.mxu0 0.0
  %970 = vmatprep.subr.mxu0 0.0
  %971 = vmatpush2.msra.mxu0 0.0
  %972 = vmatprep.mubr.f32.mxu0 0.0
  %973 = vmatmul.mubr.f32.gmra.mxu0 %v906
  %v974 = vpop.f32.mrf.mxu0
  %v975 = vadd.f32 0.0, %v974
  %v976 = vpop.f32.mrf.mxu0
  %v977 = vadd.f32 0.0, %v976
  %978 = vdwg.mxu0
  %v979 = vadd.f32 %v903, %v975
  %v980 = vadd.f32 %v904, %v977
  %v981 = vxor.u32 %v979, 2147483648
  %v982 = vxor.u32 %v980, 2147483648
  %v983 = vmul.f32 %v981, 1.442695
  %v984 = vpow.pop %v983
  %v985 = vmul.f32 %v982, 1.442695
  %v986 = vpow.pop %v985
  %v987 = vadd.f32 %v984, 1.0
  %v988 = vadd.f32 %v986, 1.0
  %v989 = vrcp.pop %v987
  %v990 = vmul.f32 1.0, %v989
  %v991 = vrcp.pop %v988
  %v992 = vmul.f32 1.0, %v991
  %v993 = vtanh.pop %v980
  %v994 = vmul.f32 %v990, %v891
  %996 = vrot.lane.b32.xlu0 %v993, 64
  %v997 = vpop.permute.xlu0 %996
  %v999 = vmul.f32 %v990, %v997
  %1001 = vrot.lane.b32.xlu0 %v999, 64
  %v1002 = vpop.permute.xlu0 %1001
  %v1004 = vadd.f32 %v994, %v1002
  %v1005 = vtanh.pop %v1004
  %1007 = vrot.lane.b32.xlu0 %v1005, 64
  %v1008 = vpop.permute.xlu0 %1007
  %v1010 = vmul.f32 %v992, %v1008
  %s1011 = scalar_lea.vmem %s4, 48
  %1012 = vst.msk [vmem:[%s1011] sm:$0xff] %vm53, %v1010
  %s1013 = smul.u32 7, 2
  %s1014 = smul.addr %s1013, 8
  %s1015 = scalar_lea.vmem [#allocation2], %s1014
  %v1016 = vld [vmem:[%s1015] sm:$0xff]
  %v1017 = vld [vmem:[%s1015 + $0x8] sm:$0xff]
  %v1019 = vsel %vm53, %v1010, 0
  %1021 = vmatprep.subr.mxu0 0.0
  %1022 = vmatpush1.msra.mxu0 0.0
  %1023 = vmatprep.subr.mxu0 0.0
  %1024 = vmatpush1.msra.mxu0 0.0
  %1025 = vmatprep.subr.mxu0 0.0
  %1026 = vmatpush1.msra.mxu0 0.0
  %1027 = vmatprep.subr.mxu0 0.0
  %1028 = vmatpush1.msra.mxu0 0.0
  %1029 = vmatprep.subr.mxu0 0.0
  %1030 = vmatpush1.msra.mxu0 0.0
  %1031 = vmatprep.subr.mxu0 0.0
  %1032 = vmatpush1.msra.mxu0 0.0
  %1033 = vmatprep.subr.mxu0 0.0
  %1034 = vmatpush1.msra.mxu0 0.0
  %1035 = vmatprep.subr.mxu0 0.0
  %1036 = vmatpush1.msra.mxu0 0.0
  %1037 = vmatprep.subr.mxu0 %v222
  %1038 = vmatpush1.msra.mxu0 %v221
  %1039 = vmatprep.subr.mxu0 %v220
  %1040 = vmatpush1.msra.mxu0 %v219
  %1041 = vmatprep.subr.mxu0 %v218
  %1042 = vmatpush1.msra.mxu0 %v217
  %1043 = vmatprep.subr.mxu0 %v216
  %1044 = vmatpush1.msra.mxu0 %v215
  %1045 = vmatprep.subr.mxu0 %v214
  %1046 = vmatpush1.msra.mxu0 %v213
  %1047 = vmatprep.subr.mxu0 %v212
  %1048 = vmatpush1.msra.mxu0 %v211
  %1049 = vmatprep.subr.mxu0 %v210
  %1050 = vmatpush1.msra.mxu0 %v209
  %1051 = vmatprep.subr.mxu0 %v208
  %1052 = vmatpush1.msra.mxu0 %v207
  %1053 = vmatprep.subr.mxu0 0.0
  %1054 = vmatpush2.msra.mxu0 0.0
  %1055 = vmatprep.subr.mxu0 0.0
  %1056 = vmatpush2.msra.mxu0 0.0
  %1057 = vmatprep.subr.mxu0 0.0
  %1058 = vmatpush2.msra.mxu0 0.0
  %1059 = vmatprep.subr.mxu0 0.0
  %1060 = vmatpush2.msra.mxu0 0.0
  %1061 = vmatprep.subr.mxu0 0.0
  %1062 = vmatpush2.msra.mxu0 0.0
  %1063 = vmatprep.subr.mxu0 0.0
  %1064 = vmatpush2.msra.mxu0 0.0
  %1065 = vmatprep.subr.mxu0 0.0
  %1066 = vmatpush2.msra.mxu0 0.0
  %1067 = vmatprep.subr.mxu0 0.0
  %1068 = vmatpush2.msra.mxu0 0.0
  %1069 = vmatprep.subr.mxu0 0.0
  %1070 = vmatpush2.msra.mxu0 0.0
  %1071 = vmatprep.subr.mxu0 0.0
  %1072 = vmatpush2.msra.mxu0 0.0
  %1073 = vmatprep.subr.mxu0 0.0
  %1074 = vmatpush2.msra.mxu0 0.0
  %1075 = vmatprep.subr.mxu0 0.0
  %1076 = vmatpush2.msra.mxu0 0.0
  %1077 = vmatprep.subr.mxu0 0.0
  %1078 = vmatpush2.msra.mxu0 0.0
  %1079 = vmatprep.subr.mxu0 0.0
  %1080 = vmatpush2.msra.mxu0 0.0
  %1081 = vmatprep.subr.mxu0 0.0
  %1082 = vmatpush2.msra.mxu0 0.0
  %1083 = vmatprep.subr.mxu0 0.0
  %1084 = vmatpush2.msra.mxu0 0.0
  %1085 = vmatprep.mubr.f32.mxu0 0.0
  %1086 = vmatmul.mubr.f32.gmra.mxu0 %v1019
  %v1087 = vpop.f32.mrf.mxu0
  %v1088 = vadd.f32 0.0, %v1087
  %v1089 = vpop.f32.mrf.mxu0
  %v1090 = vadd.f32 0.0, %v1089
  %1091 = vdwg.mxu0
  %v1092 = vadd.f32 %v1016, %v1088
  %v1093 = vadd.f32 %v1017, %v1090
  %v1094 = vxor.u32 %v1092, 2147483648
  %v1095 = vxor.u32 %v1093, 2147483648
  %v1096 = vmul.f32 %v1094, 1.442695
  %v1097 = vpow.pop %v1096
  %v1098 = vmul.f32 %v1095, 1.442695
  %v1099 = vpow.pop %v1098
  %v1100 = vadd.f32 %v1097, 1.0
  %v1101 = vadd.f32 %v1099, 1.0
  %v1102 = vrcp.pop %v1100
  %v1103 = vmul.f32 1.0, %v1102
  %v1104 = vrcp.pop %v1101
  %v1105 = vmul.f32 1.0, %v1104
  %v1106 = vtanh.pop %v1093
  %v1107 = vmul.f32 %v1103, %v1004
  %1109 = vrot.lane.b32.xlu0 %v1106, 64
  %v1110 = vpop.permute.xlu0 %1109
  %v1112 = vmul.f32 %v1103, %v1110
  %1114 = vrot.lane.b32.xlu0 %v1112, 64
  %v1115 = vpop.permute.xlu0 %1114
  %v1117 = vadd.f32 %v1107, %v1115
  %v1118 = vtanh.pop %v1117
  %1120 = vrot.lane.b32.xlu0 %v1118, 64
  %v1121 = vpop.permute.xlu0 %1120
  %v1123 = vmul.f32 %v1105, %v1121
  %s1124 = scalar_lea.vmem %s4, 56
  %1125 = vst.msk [vmem:[%s1124] sm:$0xff] %vm53, %v1123
  // Predicated region
  $region18: #{lstm_text_forward.1} parent=0 // pred_check
    _
  $region19: #{lstm_text_forward.1} parent=0 // pred_check_branch
    %1127 = sbr.rel (0) target = $region21
  $region20: #{lstm_text_forward.1} parent=0 // pred_region
    _
  $region21: #{lstm_text_forward.1} parent=0 // pred_fallthru
    _
  // Predicated region
  $region22: #{lstm_text_forward.1} parent=0 // pred_check
    _
  $region23: #{lstm_text_forward.1} parent=0 // pred_check_branch
    %1129 = sbr.rel (0) target = $region25
  $region24: #{lstm_text_forward.1} parent=0 // pred_region
    _
  $region25: #{lstm_text_forward.1} parent=0 // pred_fallthru
    _

</llo_original>
